<compile_context>
chip_gen: v7x
topology: tpu7x:2x2x1
jax: 0.10.0
libtpu: 0.0.40
codegen_flags: <defaults>
</compile_context>

<pallas_src>
import functools

import numpy as np
import jax
import jax.numpy as jnp
from jax import lax
from jax.experimental import pallas as pl
from jax.experimental.pallas import tpu as pltpu


# ------------------------------ fused kernel ------------------------------- #

def fused_slni_kernel(x_ref, wb_ref, cb_ref, w1_ref, b1_ref, w2_ref, b2_ref,
                      logits_ref, loss_ref, flat_ref, cov_ref,
                      *, batch_tile, batch_total, height):
    """conv3x3+ReLU -> fc1+ReLU -> SNI-loss accumulation -> fc2, fully fused.

    Per grid step (one batch tile):
      x_ref   : (H*Bt, W*Cin)      tile, rows ordered (h, b), lanes (w, cin)
      wb_ref  : (3*W*Cin, W*Cout)  banded conv weights, kh taps stacked on K
      cb_ref  : (1, W*Cout)        conv bias tiled over w
      w1_ref  : (H*W*Cout, Hid)    fc1 weight, flatten permutation pre-folded
      b1_ref  : (1, Hid)
      w2_ref  : (Hid, NclsPad)     fc2 weight, lane-padded to 128
      b2_ref  : (1, NclsPad)
      logits_ref : (Bt, NclsPad)   VMEM output tile (lane-dense store)
      loss_ref   : (1, 1)          SMEM scalar output (written on last step)
      flat_ref   : (Bt, H*W*Cout)  VMEM scratch: fc1 input slab
      cov_ref    : (Hid, Hid)      VMEM scratch: covariance accumulator
    """
    t = pl.program_id(0)
    Bt, H = batch_tile, height
    HB, WCin = x_ref.shape
    WC = cb_ref.shape[1]                          # W * Cout

    x2 = x_ref[...]

    # kh = 0 / 2 taps: shift by one image-row (= Bt sublanes) and zero the rows
    # that fall outside the image (same-padding in H).  Exact per batch tile
    # since each tile carries the full H extent of its samples.
    row = lax.broadcasted_iota(jnp.int32, (HB, WCin), 0)
    x_top = jnp.where(row >= Bt, pltpu.roll(x2, Bt, 0), 0.0)            # row h-1
    x_bot = jnp.where(row < HB - Bt, pltpu.roll(x2, HB - Bt, 0), 0.0)   # row h+1

    # 3x3 conv as ONE lane-dense matmul: kh taps concatenated along K (matching
    # the prep-time stacking of the banded weights); kw taps + W same-padding
    # are already folded into the weights.  K = 3*W*Cin = 384.
    x_cat = jnp.concatenate([x_top, x2, x_bot], axis=1)          # (HB, 3*W*Cin)
    h2 = jnp.dot(x_cat, wb_ref[...], preferred_element_type=jnp.float32)
    h2 = jnp.maximum(h2 + cb_ref[...], 0.0)                      # (HB, W*Cout)

    # fc1: relayout (h,b)-rows -> (b)-rows x (h,w,c)-lanes once via a VMEM slab
    # (H independent lane-aligned stores, no serialized matmul/add chains),
    # then ONE (Bt, H*W*Cout) @ (H*W*Cout, Hid) dot.
    for h in range(H):
        flat_ref[:, h * WC:(h + 1) * WC] = h2[h * Bt:(h + 1) * Bt, :]
    h1 = jnp.dot(flat_ref[...], w1_ref[...], preferred_element_type=jnp.float32)
    h1 = jnp.maximum(h1 + b1_ref[...], 0.0)                      # (Bt, Hid)

    # SNI loss: accumulate the un-normalized covariance across batch tiles; the
    # abs / diag / reduction happen only once, on the last grid step.
    @pl.when(t == 0)
    def _():
        cov_ref[...] = jnp.zeros_like(cov_ref)
    cov_ref[...] += lax.dot_general(h1, h1, (((0,), (0,)), ((), ())),
                                    preferred_element_type=jnp.float32)

    # fc2 (logits): lane-dense (Bt, 128) store.
    logits_ref[...] = (jnp.dot(h1, w2_ref[...], preferred_element_type=jnp.float32)
                       + b2_ref[...])

    @pl.when(t == pl.num_programs(0) - 1)
    def _():
        cov = cov_ref[...] * (1.0 / batch_total)
        i = lax.broadcasted_iota(jnp.int32, cov.shape, 0)
        j = lax.broadcasted_iota(jnp.int32, cov.shape, 1)
        # diag(A^T A) >= 0, so ||diag||_1 is just the masked sum of the diagonal.
        diag_sum = jnp.sum(jnp.where(i == j, cov, 0.0))
        loss_ref[0, 0] = jnp.sum(jnp.abs(cov)) - diag_sum


# ------------------------- one-time parameter prep ------------------------- #

def prepare_params(params, height, width):
    """One-time repack of PyTorch-convention weights into kernel layouts."""
    cw = np.asarray(params["conv_w"], np.float32)      # (Cout, Cin, 3, 3)
    cb = np.asarray(params["conv_b"], np.float32)      # (Cout,)
    w1 = np.asarray(params["fc1_w"], np.float32)       # (Hid, Cout*H*W), NCHW order
    b1 = np.asarray(params["fc1_b"], np.float32)       # (Hid,)
    w2 = np.asarray(params["fc2_w"], np.float32)       # (NumCls, Hid)
    b2 = np.asarray(params["fc2_b"], np.float32)       # (NumCls,)
    Cout, Cin, _, _ = cw.shape
    H, W = height, width
    hid = w1.shape[0]
    num_cls = w2.shape[0]
    ncls_pad = -(-num_cls // 128) * 128                 # lane-dense logits store

    # Banded conv weights, kh taps stacked along K to match the in-kernel
    # [x_top | x | x_bot] lane concatenation:
    #   wb[kh, w_in*Cin+ci, w_out*Cout+co] = cw[co, ci, kh, w_in-w_out+1]
    # (zero outside the 3-wide band -> same-padding in W is implicit).
    wb = np.zeros((3, W * Cin, W * Cout), np.float32)
    for kh in range(3):
        for w_out in range(W):
            for kw in range(3):
                w_in = w_out + kw - 1
                if 0 <= w_in < W:
                    wb[kh, w_in * Cin:(w_in + 1) * Cin,
                           w_out * Cout:(w_out + 1) * Cout] = cw[:, :, kh, kw].T
    wb_cat = wb.reshape(3 * W * Cin, W * Cout)

    # fc1: PyTorch computes flat @ w1.T with flat in NCHW (c, h, w) order; the
    # kernel's fc1 slab is (h, w, c) ordered -> fold the flatten permutation
    # into the weight once, flattened to a single (H*W*Cout, Hid) matrix.
    w1r = (w1.T.reshape(Cout, H, W, hid)       # (co, h, w, n)
               .transpose(1, 2, 0, 3)          # (h, w, co, n)
               .reshape(H * W * Cout, hid))

    # fc2 weight/bias zero-padded on the class (lane) dim so the per-step
    # logits store is a full 128-lane vst instead of a masked partial store.
    w2p = np.zeros((hid, ncls_pad), np.float32)
    w2p[:, :num_cls] = w2.T
    b2p = np.zeros((1, ncls_pad), np.float32)
    b2p[0, :num_cls] = b2

    return {
        "wb": jnp.asarray(wb_cat),
        "cb": jnp.asarray(np.tile(cb, W).reshape(1, W * Cout)),
        "w1": jnp.asarray(w1r),
        "b1": jnp.asarray(b1.reshape(1, -1)),
        "w2": jnp.asarray(w2p),
        "b2": jnp.asarray(b2p),
        # NOTE: "wb"/"w1" (the only sizable operands, ~0.45 MiB) could be cast
        # to bf16 with f32 accumulation to halve the one-time weight DMA on
        # v5e/v6e/v7x; kept f32 so the f32 reference check stays bit-tight, and
        # because the weights are VMEM-resident across the whole batch grid.
    }


# -------------------------------- forward ---------------------------------- #

@functools.partial(jax.jit, static_argnames=("num_cls", "batch_tile"))
def slni_module_forward(x_nchw, prep, *, num_cls, batch_tile):
    """Mirrors SLNI_Module.forward for the concrete architecture above."""
    B, Cin, H, W = x_nchw.shape
    assert B % batch_tile == 0
    Bt = batch_tile
    T = B // Bt                                   # batch-tile grid
    hid = prep["b1"].shape[1]
    ncls_pad = prep["b2"].shape[1]

    # NCHW -> tiles of rows (h, b), lanes (w, cin).  Tiny (8 KB) relayout that
    # XLA may fuse straight into the pallas_call input DMA (allow_input_fusion).
    x2 = (x_nchw.reshape(T, Bt, Cin, H, W)
                .transpose(0, 3, 1, 4, 2)          # (T, H, Bt, W, Cin)
                .reshape(T * H * Bt, W * Cin))

    logits_pad, loss = pl.pallas_call(
        functools.partial(fused_slni_kernel, batch_tile=Bt, batch_total=B,
                          height=H),
        grid=(T,),
        out_shape=(jax.ShapeDtypeStruct((B, ncls_pad), jnp.float32),
                   jax.ShapeDtypeStruct((1, 1), jnp.float32)),
        in_specs=[
            # per-tile activations; (H*Bt) rows per step.  For multi-tile runs
            # Bt should keep H*Bt a multiple of 8 (true for any Bt here) and
            # stay well under v7x's 64 MiB VMEM (trivially true at this size).
            pl.BlockSpec((H * Bt, W * Cin), lambda t: (t, 0)),
            # weights: constant block index -> DMA'd once, VMEM-resident.
            pl.BlockSpec(prep["wb"].shape, lambda t: (0, 0)),
            pl.BlockSpec(prep["cb"].shape, lambda t: (0, 0)),
            pl.BlockSpec(prep["w1"].shape, lambda t: (0, 0)),
            pl.BlockSpec(prep["b1"].shape, lambda t: (0, 0)),
            pl.BlockSpec(prep["w2"].shape, lambda t: (0, 0)),
            pl.BlockSpec(prep["b2"].shape, lambda t: (0, 0)),
        ],
        out_specs=(
            pl.BlockSpec((Bt, ncls_pad), lambda t: (t, 0)),
            pl.BlockSpec(memory_space=pltpu.MemorySpace.SMEM),
        ),
        scratch_shapes=[
            pltpu.VMEM((Bt, prep["w1"].shape[0]), jnp.float32),   # fc1 slab
            pltpu.VMEM((hid, hid), jnp.float32),                  # cov accumulator
        ],
        compiler_params=pltpu.CompilerParams(
            # The batch axis is a reduction for the SNI covariance, so it must
            # stay "arbitrary".  (To exploit v7x's 2nd TensorCore one would emit
            # per-core partial covariances and combine them outside the kernel.)
            dimension_semantics=("arbitrary",),
            # Let XLA fuse the NCHW->(h,b)x(w,cin) transpose into the input DMA.
            allow_input_fusion=[True, False, False, False, False, False, False],
        ),
    )(x2, prep["wb"], prep["cb"], prep["w1"], prep["b1"],
      prep["w2"], prep["b2"])
    return logits_pad[:, :num_cls], loss[0, 0]


# ----------------------------- pure-JAX reference --------------------------- #

def reference_forward(x_nchw, params):
    conv = lax.conv_general_dilated(
        x_nchw, params["conv_w"], window_strides=(1, 1), padding="SAME",
        dimension_numbers=("NCHW", "OIHW", "NCHW"))
    h = jnp.maximum(conv + params["conv_b"][None, :, None, None], 0.0)
    flat = h.reshape(h.shape[0], -1)                     # x.view(B, C*H*W), NCHW
    h1 = jnp.maximum(flat @ params["fc1_w"].T + params["fc1_b"], 0.0)
    cov = (h1.T @ h1) / h1.shape[0]
    loss = jnp.sum(jnp.abs(cov)) - jnp.sum(jnp.abs(jnp.diag(cov)))
    logits = h1 @ params["fc2_w"].T + params["fc2_b"]
    return logits, loss


# ---------------------------------- main ----------------------------------- #

if __name__ == "__main__":
    B, Cin, H, W = 2, 4, 16, 16
    Cout, Hid, NumCls = 8, 32, 10

    key = jax.random.PRNGKey(0)
    k_x, k_cw, k_cb, k_w1, k_b1, k_w2, k_b2 = jax.random.split(key, 7)

    x = jax.random.normal(k_x, (B, Cin, H, W), dtype=jnp.float32)   # NCHW input

    # Parameters in PyTorch layout: Conv2d (Cout,Cin,3,3); Linear (out,in).
    params = {
        "conv_w": 0.1 * jax.random.normal(k_cw, (Cout, Cin, 3, 3), dtype=jnp.float32),
        "conv_b": 0.1 * jax.random.normal(k_cb, (Cout,), dtype=jnp.float32),
        "fc1_w": 0.02 * jax.random.normal(k_w1, (Hid, Cout * H * W), dtype=jnp.float32),
        "fc1_b": 0.1 * jax.random.normal(k_b1, (Hid,), dtype=jnp.float32),
        "fc2_w": 0.1 * jax.random.normal(k_w2, (NumCls, Hid), dtype=jnp.float32),
        "fc2_b": 0.1 * jax.random.normal(k_b2, (NumCls,), dtype=jnp.float32),
    }

    prep = prepare_params(params, H, W)        # one-time weight repack

    logits, loss = slni_module_forward(x, prep, num_cls=NumCls, batch_tile=B)
    logits, loss = jax.block_until_ready((logits, loss))

    ref_logits, ref_loss = reference_forward(x, params)
    assert logits.shape == (B, NumCls)
    assert jnp.allclose(logits, ref_logits, rtol=2e-4, atol=2e-4), (
        float(jnp.max(jnp.abs(logits - ref_logits))))
    assert jnp.allclose(loss, ref_loss, rtol=2e-4, atol=2e-4), (float(loss), float(ref_loss))

    print("KERNEL_OK")
</pallas_src>

<mosaic_0001>
module attributes {stable_mosaic.version = 11 : i64} {
  func.func @fused_slni_kernel(%arg0: i32, %arg1: memref<32x64xf32, #tpu.memory_space<vmem>>, %arg2: memref<192x128xf32, #tpu.memory_space<vmem>>, %arg3: memref<1x128xf32, #tpu.memory_space<vmem>>, %arg4: memref<2048x32xf32, #tpu.memory_space<vmem>>, %arg5: memref<1x32xf32, #tpu.memory_space<vmem>>, %arg6: memref<32x128xf32, #tpu.memory_space<vmem>>, %arg7: memref<1x128xf32, #tpu.memory_space<vmem>>, %arg8: memref<2x128xf32, #tpu.memory_space<vmem>>, %arg9: memref<1x1xf32, #tpu.memory_space<smem>>, %arg10: memref<2x2048xf32, #tpu.memory_space<vmem>>, %arg11: memref<32x32xf32, #tpu.memory_space<vmem>>) attributes {dimension_semantics = [#tpu.dimension_semantics<arbitrary>], iteration_bounds = array<i64: 1>, scalar_prefetch = 0 : i64, scratch_operands = 2 : i64, tpu.core_type = #tpu.core_type<tc>, window_params = [{transform_indices = @transform_0, window_bounds = array<i64: 32, 64>}, {pipeline_mode = #tpu.pipeline_mode<synchronous>, transform_indices = @transform_1, window_bounds = array<i64: 192, 128>}, {pipeline_mode = #tpu.pipeline_mode<synchronous>, transform_indices = @transform_2, window_bounds = array<i64: 1, 128>}, {pipeline_mode = #tpu.pipeline_mode<synchronous>, transform_indices = @transform_3, window_bounds = array<i64: 2048, 32>}, {pipeline_mode = #tpu.pipeline_mode<synchronous>, transform_indices = @transform_4, window_bounds = array<i64: 1, 32>}, {pipeline_mode = #tpu.pipeline_mode<synchronous>, transform_indices = @transform_5, window_bounds = array<i64: 32, 128>}, {pipeline_mode = #tpu.pipeline_mode<synchronous>, transform_indices = @transform_6, window_bounds = array<i64: 1, 128>}, {transform_indices = @transform_7, window_bounds = array<i64: 2, 128>}, {transform_indices = @transform_8, window_bounds = array<i64: 1, 1>}]} {
    %c0 = arith.constant 0 : index
    %c0_0 = arith.constant 0 : index
    %0 = vector.load %arg1[%c0, %c0_0] : memref<32x64xf32, #tpu.memory_space<vmem>>, vector<32x64xf32>
    %1 = tpu.iota {dimensions = array<i32: 0>} : vector<32x64xi32>
    %c2_i32 = arith.constant 2 : i32
    %2 = vector.broadcast %c2_i32 : i32 to vector<32x64xi32>
    %3 = arith.cmpi sge, %1, %2 : vector<32x64xi32>
    %c2_i32_1 = arith.constant 2 : i32
    %4 = tpu.dynamic_rotate %0 by %c2_i32_1 dim 0 : vector<32x64xf32>, i32 -> vector<32x64xf32>
    %cst = arith.constant 0.000000e+00 : f32
    %5 = vector.broadcast %cst : f32 to vector<32x64xf32>
    %6 = arith.select %3, %4, %5 : vector<32x64xi1>, vector<32x64xf32>
    %c30_i32 = arith.constant 30 : i32
    %7 = vector.broadcast %c30_i32 : i32 to vector<32x64xi32>
    %8 = arith.cmpi slt, %1, %7 : vector<32x64xi32>
    %c30_i32_2 = arith.constant 30 : i32
    %9 = tpu.dynamic_rotate %0 by %c30_i32_2 dim 0 : vector<32x64xf32>, i32 -> vector<32x64xf32>
    %cst_3 = arith.constant 0.000000e+00 : f32
    %10 = vector.broadcast %cst_3 : f32 to vector<32x64xf32>
    %11 = arith.select %8, %9, %10 : vector<32x64xi1>, vector<32x64xf32>
    %12 = tpu.concatenate %6, %0, %11 in 1 : vector<32x64xf32>, vector<32x64xf32>, vector<32x64xf32> -> vector<32x192xf32>
    %c0_4 = arith.constant 0 : index
    %c0_5 = arith.constant 0 : index
    %13 = vector.load %arg2[%c0_4, %c0_5] : memref<192x128xf32, #tpu.memory_space<vmem>>, vector<192x128xf32>
    %cst_6 = arith.constant dense<0.000000e+00> : vector<32x128xf32>
    %14 = tpu.matmul %12, %13, %cst_6 {dimension_numbers = #tpu.dot_dimension_numbers<[1], [0], [0], [1], [0, 0, 1, 1], [], []>} : vector<32x192xf32>, vector<192x128xf32>, vector<32x128xf32> -> vector<32x128xf32>
    %c0_7 = arith.constant 0 : index
    %c0_8 = arith.constant 0 : index
    %15 = vector.load %arg3[%c0_7, %c0_8] : memref<1x128xf32, #tpu.memory_space<vmem>>, vector<1x128xf32>
    %16 = vector.broadcast %15 : vector<1x128xf32> to vector<32x128xf32>
    %17 = arith.addf %14, %16 : vector<32x128xf32>
    %cst_9 = arith.constant 0.000000e+00 : f32
    %18 = vector.broadcast %cst_9 : f32 to vector<32x128xf32>
    %19 = arith.maximumf %17, %18 : vector<32x128xf32>
    %20 = vector.extract_strided_slice %19 {offsets = [0, 0], sizes = [2, 128], strides = [1, 1]} : vector<32x128xf32> to vector<2x128xf32>
    %c0_10 = arith.constant 0 : index
    %c0_11 = arith.constant 0 : index
    %21 = vector.load %arg10[%c0_10, %c0_11] : memref<2x2048xf32, #tpu.memory_space<vmem>>, vector<2x128xf32>
    tpu.vector_store %arg10[%c0_10, %c0_11], %20 {strides = array<i32>} : memref<2x2048xf32, #tpu.memory_space<vmem>>, vector<2x128xf32>,
    %22 = vector.extract_strided_slice %19 {offsets = [2, 0], sizes = [2, 128], strides = [1, 1]} : vector<32x128xf32> to vector<2x128xf32>
    %c0_12 = arith.constant 0 : index
    %c128 = arith.constant 128 : index
    %23 = vector.load %arg10[%c0_12, %c128] : memref<2x2048xf32, #tpu.memory_space<vmem>>, vector<2x128xf32>
    tpu.vector_store %arg10[%c0_12, %c128], %22 {strides = array<i32>} : memref<2x2048xf32, #tpu.memory_space<vmem>>, vector<2x128xf32>,
    %24 = vector.extract_strided_slice %19 {offsets = [4, 0], sizes = [2, 128], strides = [1, 1]} : vector<32x128xf32> to vector<2x128xf32>
    %c0_13 = arith.constant 0 : index
    %c256 = arith.constant 256 : index
    %25 = vector.load %arg10[%c0_13, %c256] : memref<2x2048xf32, #tpu.memory_space<vmem>>, vector<2x128xf32>
    tpu.vector_store %arg10[%c0_13, %c256], %24 {strides = array<i32>} : memref<2x2048xf32, #tpu.memory_space<vmem>>, vector<2x128xf32>,
    %26 = vector.extract_strided_slice %19 {offsets = [6, 0], sizes = [2, 128], strides = [1, 1]} : vector<32x128xf32> to vector<2x128xf32>
    %c0_14 = arith.constant 0 : index
    %c384 = arith.constant 384 : index
    %27 = vector.load %arg10[%c0_14, %c384] : memref<2x2048xf32, #tpu.memory_space<vmem>>, vector<2x128xf32>
    tpu.vector_store %arg10[%c0_14, %c384], %26 {strides = array<i32>} : memref<2x2048xf32, #tpu.memory_space<vmem>>, vector<2x128xf32>,
    %28 = vector.extract_strided_slice %19 {offsets = [8, 0], sizes = [2, 128], strides = [1, 1]} : vector<32x128xf32> to vector<2x128xf32>
    %c0_15 = arith.constant 0 : index
    %c512 = arith.constant 512 : index
    %29 = vector.load %arg10[%c0_15, %c512] : memref<2x2048xf32, #tpu.memory_space<vmem>>, vector<2x128xf32>
    tpu.vector_store %arg10[%c0_15, %c512], %28 {strides = array<i32>} : memref<2x2048xf32, #tpu.memory_space<vmem>>, vector<2x128xf32>,
    %30 = vector.extract_strided_slice %19 {offsets = [10, 0], sizes = [2, 128], strides = [1, 1]} : vector<32x128xf32> to vector<2x128xf32>
    %c0_16 = arith.constant 0 : index
    %c640 = arith.constant 640 : index
    %31 = vector.load %arg10[%c0_16, %c640] : memref<2x2048xf32, #tpu.memory_space<vmem>>, vector<2x128xf32>
    tpu.vector_store %arg10[%c0_16, %c640], %30 {strides = array<i32>} : memref<2x2048xf32, #tpu.memory_space<vmem>>, vector<2x128xf32>,
    %32 = vector.extract_strided_slice %19 {offsets = [12, 0], sizes = [2, 128], strides = [1, 1]} : vector<32x128xf32> to vector<2x128xf32>
    %c0_17 = arith.constant 0 : index
    %c768 = arith.constant 768 : index
    %33 = vector.load %arg10[%c0_17, %c768] : memref<2x2048xf32, #tpu.memory_space<vmem>>, vector<2x128xf32>
    tpu.vector_store %arg10[%c0_17, %c768], %32 {strides = array<i32>} : memref<2x2048xf32, #tpu.memory_space<vmem>>, vector<2x128xf32>,
    %34 = vector.extract_strided_slice %19 {offsets = [14, 0], sizes = [2, 128], strides = [1, 1]} : vector<32x128xf32> to vector<2x128xf32>
    %c0_18 = arith.constant 0 : index
    %c896 = arith.constant 896 : index
    %35 = vector.load %arg10[%c0_18, %c896] : memref<2x2048xf32, #tpu.memory_space<vmem>>, vector<2x128xf32>
    tpu.vector_store %arg10[%c0_18, %c896], %34 {strides = array<i32>} : memref<2x2048xf32, #tpu.memory_space<vmem>>, vector<2x128xf32>,
    %36 = vector.extract_strided_slice %19 {offsets = [16, 0], sizes = [2, 128], strides = [1, 1]} : vector<32x128xf32> to vector<2x128xf32>
    %c0_19 = arith.constant 0 : index
    %c1024 = arith.constant 1024 : index
    %37 = vector.load %arg10[%c0_19, %c1024] : memref<2x2048xf32, #tpu.memory_space<vmem>>, vector<2x128xf32>
    tpu.vector_store %arg10[%c0_19, %c1024], %36 {strides = array<i32>} : memref<2x2048xf32, #tpu.memory_space<vmem>>, vector<2x128xf32>,
    %38 = vector.extract_strided_slice %19 {offsets = [18, 0], sizes = [2, 128], strides = [1, 1]} : vector<32x128xf32> to vector<2x128xf32>
    %c0_20 = arith.constant 0 : index
    %c1152 = arith.constant 1152 : index
    %39 = vector.load %arg10[%c0_20, %c1152] : memref<2x2048xf32, #tpu.memory_space<vmem>>, vector<2x128xf32>
    tpu.vector_store %arg10[%c0_20, %c1152], %38 {strides = array<i32>} : memref<2x2048xf32, #tpu.memory_space<vmem>>, vector<2x128xf32>,
    %40 = vector.extract_strided_slice %19 {offsets = [20, 0], sizes = [2, 128], strides = [1, 1]} : vector<32x128xf32> to vector<2x128xf32>
    %c0_21 = arith.constant 0 : index
    %c1280 = arith.constant 1280 : index
    %41 = vector.load %arg10[%c0_21, %c1280] : memref<2x2048xf32, #tpu.memory_space<vmem>>, vector<2x128xf32>
    tpu.vector_store %arg10[%c0_21, %c1280], %40 {strides = array<i32>} : memref<2x2048xf32, #tpu.memory_space<vmem>>, vector<2x128xf32>,
    %42 = vector.extract_strided_slice %19 {offsets = [22, 0], sizes = [2, 128], strides = [1, 1]} : vector<32x128xf32> to vector<2x128xf32>
    %c0_22 = arith.constant 0 : index
    %c1408 = arith.constant 1408 : index
    %43 = vector.load %arg10[%c0_22, %c1408] : memref<2x2048xf32, #tpu.memory_space<vmem>>, vector<2x128xf32>
    tpu.vector_store %arg10[%c0_22, %c1408], %42 {strides = array<i32>} : memref<2x2048xf32, #tpu.memory_space<vmem>>, vector<2x128xf32>,
    %44 = vector.extract_strided_slice %19 {offsets = [24, 0], sizes = [2, 128], strides = [1, 1]} : vector<32x128xf32> to vector<2x128xf32>
    %c0_23 = arith.constant 0 : index
    %c1536 = arith.constant 1536 : index
    %45 = vector.load %arg10[%c0_23, %c1536] : memref<2x2048xf32, #tpu.memory_space<vmem>>, vector<2x128xf32>
    tpu.vector_store %arg10[%c0_23, %c1536], %44 {strides = array<i32>} : memref<2x2048xf32, #tpu.memory_space<vmem>>, vector<2x128xf32>,
    %46 = vector.extract_strided_slice %19 {offsets = [26, 0], sizes = [2, 128], strides = [1, 1]} : vector<32x128xf32> to vector<2x128xf32>
    %c0_24 = arith.constant 0 : index
    %c1664 = arith.constant 1664 : index
    %47 = vector.load %arg10[%c0_24, %c1664] : memref<2x2048xf32, #tpu.memory_space<vmem>>, vector<2x128xf32>
    tpu.vector_store %arg10[%c0_24, %c1664], %46 {strides = array<i32>} : memref<2x2048xf32, #tpu.memory_space<vmem>>, vector<2x128xf32>,
    %48 = vector.extract_strided_slice %19 {offsets = [28, 0], sizes = [2, 128], strides = [1, 1]} : vector<32x128xf32> to vector<2x128xf32>
    %c0_25 = arith.constant 0 : index
    %c1792 = arith.constant 1792 : index
    %49 = vector.load %arg10[%c0_25, %c1792] : memref<2x2048xf32, #tpu.memory_space<vmem>>, vector<2x128xf32>
    tpu.vector_store %arg10[%c0_25, %c1792], %48 {strides = array<i32>} : memref<2x2048xf32, #tpu.memory_space<vmem>>, vector<2x128xf32>,
    %50 = vector.extract_strided_slice %19 {offsets = [30, 0], sizes = [2, 128], strides = [1, 1]} : vector<32x128xf32> to vector<2x128xf32>
    %c0_26 = arith.constant 0 : index
    %c1920 = arith.constant 1920 : index
    %51 = vector.load %arg10[%c0_26, %c1920] : memref<2x2048xf32, #tpu.memory_space<vmem>>, vector<2x128xf32>
    tpu.vector_store %arg10[%c0_26, %c1920], %50 {strides = array<i32>} : memref<2x2048xf32, #tpu.memory_space<vmem>>, vector<2x128xf32>,
    %c0_27 = arith.constant 0 : index
    %c0_28 = arith.constant 0 : index
    %52 = vector.load %arg10[%c0_27, %c0_28] : memref<2x2048xf32, #tpu.memory_space<vmem>>, vector<2x2048xf32>
    %c0_29 = arith.constant 0 : index
    %c0_30 = arith.constant 0 : index
    %53 = vector.load %arg4[%c0_29, %c0_30] : memref<2048x32xf32, #tpu.memory_space<vmem>>, vector<2048x32xf32>
    %cst_31 = arith.constant dense<0.000000e+00> : vector<2x32xf32>
    %54 = tpu.matmul %52, %53, %cst_31 {dimension_numbers = #tpu.dot_dimension_numbers<[1], [0], [0], [1], [0, 0, 1, 1], [], []>} : vector<2x2048xf32>, vector<2048x32xf32>, vector<2x32xf32> -> vector<2x32xf32>
    %c0_32 = arith.constant 0 : index
    %c0_33 = arith.constant 0 : index
    %55 = vector.load %arg5[%c0_32, %c0_33] : memref<1x32xf32, #tpu.memory_space<vmem>>, vector<1x32xf32>
    %56 = vector.broadcast %55 : vector<1x32xf32> to vector<2x32xf32>
    %57 = arith.addf %54, %56 : vector<2x32xf32>
    %cst_34 = arith.constant 0.000000e+00 : f32
    %58 = vector.broadcast %cst_34 : f32 to vector<2x32xf32>
    %59 = arith.maximumf %57, %58 : vector<2x32xf32>
    %c0_i32 = arith.constant 0 : i32
    %60 = arith.cmpi eq, %arg0, %c0_i32 : i32
    %61 = arith.extui %60 : i1 to i32
    %c0_i32_35 = arith.constant 0 : i32
    %62 = arith.cmpi ne, %61, %c0_i32_35 : i32
    scf.if %62 {
      %cst_50 = arith.constant 0.000000e+00 : f32
      %76 = vector.broadcast %cst_50 : f32 to vector<32x32xf32>
      %c0_51 = arith.constant 0 : index
      %c0_52 = arith.constant 0 : index
      %77 = vector.load %arg11[%c0_51, %c0_52] : memref<32x32xf32, #tpu.memory_space<vmem>>, vector<32x32xf32>
      tpu.vector_store %arg11[%c0_51, %c0_52], %76 {strides = array<i32>} : memref<32x32xf32, #tpu.memory_space<vmem>>, vector<32x32xf32>,
    } else {
    }
    %c0_36 = arith.constant 0 : index
    %c0_37 = arith.constant 0 : index
    %63 = vector.load %arg11[%c0_36, %c0_37] : memref<32x32xf32, #tpu.memory_space<vmem>>, vector<32x32xf32>
    %cst_38 = arith.constant dense<0.000000e+00> : vector<32x32xf32>
    %64 = tpu.matmul %59, %59, %cst_38 {dimension_numbers = #tpu.dot_dimension_numbers<[0], [0], [1], [1], [0, 1, 1, 1], [], []>} : vector<2x32xf32>, vector<2x32xf32>, vector<32x32xf32> -> vector<32x32xf32>
    %65 = arith.addf %63, %64 : vector<32x32xf32>
    %c0_39 = arith.constant 0 : index
    %c0_40 = arith.constant 0 : index
    %66 = vector.load %arg11[%c0_39, %c0_40] : memref<32x32xf32, #tpu.memory_space<vmem>>, vector<32x32xf32>
    tpu.vector_store %arg11[%c0_39, %c0_40], %65 {strides = array<i32>} : memref<32x32xf32, #tpu.memory_space<vmem>>, vector<32x32xf32>,
    %c0_41 = arith.constant 0 : index
    %c0_42 = arith.constant 0 : index
    %67 = vector.load %arg6[%c0_41, %c0_42] : memref<32x128xf32, #tpu.memory_space<vmem>>, vector<32x128xf32>
    %cst_43 = arith.constant dense<0.000000e+00> : vector<2x128xf32>
    %68 = tpu.matmul %59, %67, %cst_43 {dimension_numbers = #tpu.dot_dimension_numbers<[1], [0], [0], [1], [0, 0, 1, 1], [], []>} : vector<2x32xf32>, vector<32x128xf32>, vector<2x128xf32> -> vector<2x128xf32>
    %c0_44 = arith.constant 0 : index
    %c0_45 = arith.constant 0 : index
    %69 = vector.load %arg7[%c0_44, %c0_45] : memref<1x128xf32, #tpu.memory_space<vmem>>, vector<1x128xf32>
    %70 = vector.broadcast %69 : vector<1x128xf32> to vector<2x128xf32>
    %71 = arith.addf %68, %70 : vector<2x128xf32>
    %c0_46 = arith.constant 0 : index
    %c0_47 = arith.constant 0 : index
    %72 = vector.load %arg8[%c0_46, %c0_47] : memref<2x128xf32, #tpu.memory_space<vmem>>, vector<2x128xf32>
    tpu.vector_store %arg8[%c0_46, %c0_47], %71 {strides = array<i32>} : memref<2x128xf32, #tpu.memory_space<vmem>>, vector<2x128xf32>,
    %c0_i32_48 = arith.constant 0 : i32
    %73 = arith.cmpi eq, %arg0, %c0_i32_48 : i32
    %74 = arith.extui %73 : i1 to i32
    %c0_i32_49 = arith.constant 0 : i32
    %75 = arith.cmpi ne, %74, %c0_i32_49 : i32
    scf.if %75 {
      %c0_50 = arith.constant 0 : index
      %c0_51 = arith.constant 0 : index
      %76 = vector.load %arg11[%c0_50, %c0_51] : memref<32x32xf32, #tpu.memory_space<vmem>>, vector<32x32xf32>
      %cst_52 = arith.constant 5.000000e-01 : f32
      %77 = vector.broadcast %cst_52 : f32 to vector<32x32xf32>
      %78 = arith.mulf %76, %77 : vector<32x32xf32>
      %79 = tpu.iota {dimensions = array<i32: 0>} : vector<32x32xi32>
      %80 = tpu.iota {dimensions = array<i32: 1>} : vector<32x32xi32>
      %81 = arith.cmpi eq, %79, %80 : vector<32x32xi32>
      %cst_53 = arith.constant 0.000000e+00 : f32
      %82 = vector.broadcast %cst_53 : f32 to vector<32x32xf32>
      %83 = arith.select %81, %78, %82 : vector<32x32xi1>, vector<32x32xf32>
      %84 = vector.shape_cast %83 : vector<32x32xf32> to vector<1x32x32xf32>
      %cst_54 = arith.constant dense<0.000000e+00> : vector<1xf32>
      %85 = vector.multi_reduction <add>, %84, %cst_54 [1, 2] : vector<1x32x32xf32> to vector<1xf32>
      %86 = vector.shape_cast %85 : vector<1xf32> to vector<1x1x1xf32>
      %87 = vector.extract %86[0, 0, 0] : f32 from vector<1x1x1xf32>
      %88 = math.absf %78 : vector<32x32xf32>
      %89 = vector.shape_cast %88 : vector<32x32xf32> to vector<1x32x32xf32>
      %cst_55 = arith.constant dense<0.000000e+00> : vector<1xf32>
      %90 = vector.multi_reduction <add>, %89, %cst_55 [1, 2] : vector<1x32x32xf32> to vector<1xf32>
      %91 = vector.shape_cast %90 : vector<1xf32> to vector<1x1x1xf32>
      %92 = vector.extract %91[0, 0, 0] : f32 from vector<1x1x1xf32>
      %93 = arith.subf %92, %87 : f32
      %c0_56 = arith.constant 0 : index
      %c0_57 = arith.constant 0 : index
      %94 = memref.load %arg9[%c0_56, %c0_57] : memref<1x1xf32, #tpu.memory_space<smem>>
      memref.store %93, %arg9[%c0_56, %c0_57] : memref<1x1xf32, #tpu.memory_space<smem>>
    } else {
    }
    return
  }
  func.func @transform_0(%arg0: i32) -> (i32, i32) {
    %c0_i32 = arith.constant 0 : i32
    %c0_i32_0 = arith.constant 0 : i32
    return %arg0, %c0_i32 : i32, i32
  }
  func.func @transform_1(%arg0: i32) -> (i32, i32) {
    %c0_i32 = arith.constant 0 : i32
    %c0_i32_0 = arith.constant 0 : i32
    %c0_i32_1 = arith.constant 0 : i32
    return %c0_i32, %c0_i32_0 : i32, i32
  }
  func.func @transform_2(%arg0: i32) -> (i32, i32) {
    %c0_i32 = arith.constant 0 : i32
    %c0_i32_0 = arith.constant 0 : i32
    %c0_i32_1 = arith.constant 0 : i32
    return %c0_i32, %c0_i32_0 : i32, i32
  }
  func.func @transform_3(%arg0: i32) -> (i32, i32) {
    %c0_i32 = arith.constant 0 : i32
    %c0_i32_0 = arith.constant 0 : i32
    %c0_i32_1 = arith.constant 0 : i32
    return %c0_i32, %c0_i32_0 : i32, i32
  }
  func.func @transform_4(%arg0: i32) -> (i32, i32) {
    %c0_i32 = arith.constant 0 : i32
    %c0_i32_0 = arith.constant 0 : i32
    %c0_i32_1 = arith.constant 0 : i32
    return %c0_i32, %c0_i32_0 : i32, i32
  }
  func.func @transform_5(%arg0: i32) -> (i32, i32) {
    %c0_i32 = arith.constant 0 : i32
    %c0_i32_0 = arith.constant 0 : i32
    %c0_i32_1 = arith.constant 0 : i32
    return %c0_i32, %c0_i32_0 : i32, i32
  }
  func.func @transform_6(%arg0: i32) -> (i32, i32) {
    %c0_i32 = arith.constant 0 : i32
    %c0_i32_0 = arith.constant 0 : i32
    %c0_i32_1 = arith.constant 0 : i32
    return %c0_i32, %c0_i32_0 : i32, i32
  }
  func.func @transform_7(%arg0: i32) -> (i32, i32) {
    %c0_i32 = arith.constant 0 : i32
    %c0_i32_0 = arith.constant 0 : i32
    return %arg0, %c0_i32 : i32, i32
  }
  func.func @transform_8(%arg0: i32) -> (i32, i32) {
    %c0_i32 = arith.constant 0 : i32
    %c0_i32_0 = arith.constant 0 : i32
    %c0_i32_1 = arith.constant 0 : i32
    return %c0_i32, %c0_i32_0 : i32, i32
  }
}

</mosaic_0001>

<llo_original>
// kernel: slni_module_forward.1
$region0: #{slni_module_forward.1}
  #allocation0 [shape = 'u32[]', space=smem, size = 0x4, offset = 0x4, fixed_abs, tag = 'smem constant byte address 0x4 - core index']
  #allocation1 [shape = 'u32[144,128]{1,0:T(1,128)}', space=vmem, size = 0x12000, scoped, tag = 'internal scratch']
  #allocation2 [shape = 'f32[2,2048]{1,0:T(2,128)}', space=vmem, size = 0x4000, scoped, tag = 'scratch operand']
  #allocation3 [shape = 'f32[32,32]{1,0:T(8,128)}', space=vmem, size = 0x4000, scoped, tag = 'scratch operand']
  %s0 = inlined_call_operand.vmem [shape: f32[32,64], index: 0, kind: input, shape index: {}]
  %s1 = inlined_call_operand.vmem [shape: f32[192,128], index: 1, kind: input, shape index: {}]
  %s2 = inlined_call_operand.vmem [shape: f32[1,128], index: 2, kind: input, shape index: {}]
  %s3 = inlined_call_operand.vmem [shape: f32[2048,32], index: 3, kind: input, shape index: {}]
  %s4 = inlined_call_operand.vmem [shape: f32[1,32], index: 4, kind: input, shape index: {}]
  %s5 = inlined_call_operand.vmem [shape: f32[32,128], index: 5, kind: input, shape index: {}]
  %s6 = inlined_call_operand.vmem [shape: f32[1,128], index: 6, kind: input, shape index: {}]
  %s7 = inlined_call_operand.hbm [shape: f32[2,128], index: 7, kind: output, shape index: {0}]
  %s8 = inlined_call_operand.hbm [shape: f32[1,1], index: 8, kind: output, shape index: {1}]
  %9 = xla_tuple %s7, %s8
  %s10 = sld [smem:[#allocation0]]
  $region54: #{slni_module_forward.1} parent=0
    _
  %s12 = ssub.s32 1, %s10
  %s13 = scalar_select 0, %s12, %s10
  $region1: #{slni_module_forward.1} parent=0
    #allocation4 [shape = 'u8[1024]{0}', space=vmem, size = 0x400, scoped, tag = 'output window, operand 0, single buffered']
    #allocation5 [shape = 's32[1]{0}', space=sflag, size = 0x4, scoped, tag = 'scoped memory for slni_module_forward.1']
    #allocation6 [shape = 's32[1]{0}', space=sflag, size = 0x4, scoped, tag = 'scoped memory for slni_module_forward.1']
    #allocation7 [shape = 'u8[512]{0}', space=smem, size = 0x200, scoped, tag = 'output window, operand 1, single buffered']
    %14 = vsyncpa [#allocation5], 0
    %15 = vsyncpa [#allocation6], 0
    // Predicated region
    $region2: #{slni_module_forward.1} parent=1 // pred_check
      _
    $region3: #{slni_module_forward.1} parent=1 // pred_check_branch
      %17 = sbr.rel (0) target = $region5
    $region4: #{slni_module_forward.1} parent=1 // pred_region
      _
    $region5: #{slni_module_forward.1} parent=1 // pred_fallthru
      _
    // Predicated region
    $region6: #{slni_module_forward.1} parent=1 // pred_check
      _
    $region7: #{slni_module_forward.1} parent=1 // pred_check_branch
      %19 = sbr.rel (0) target = $region9
    $region8: #{slni_module_forward.1} parent=1 // pred_region
      _
    $region9: #{slni_module_forward.1} parent=1 // pred_fallthru
      _
    // Predicated region
    $region10: #{slni_module_forward.1} parent=1 // pred_check
      _
    $region11: #{slni_module_forward.1} parent=1 // pred_check_branch
      %21 = sbr.rel (0) target = $region13
    $region12: #{slni_module_forward.1} parent=1 // pred_region
      _
    $region13: #{slni_module_forward.1} parent=1 // pred_fallthru
      _
    // Predicated region
    $region14: #{slni_module_forward.1} parent=1 // pred_check
      _
    $region15: #{slni_module_forward.1} parent=1 // pred_check_branch
      %23 = sbr.rel (0) target = $region17
    $region16: #{slni_module_forward.1} parent=1 // pred_region
      _
    $region17: #{slni_module_forward.1} parent=1 // pred_fallthru
      _
    // Predicated region
    $region18: #{slni_module_forward.1} parent=1 // pred_check
      _
    $region19: #{slni_module_forward.1} parent=1 // pred_check_branch
      %25 = sbr.rel (0) target = $region21
    $region20: #{slni_module_forward.1} parent=1 // pred_region
      _
    $region21: #{slni_module_forward.1} parent=1 // pred_fallthru
      _
    // Predicated region
    $region22: #{slni_module_forward.1} parent=1 // pred_check
      _
    $region23: #{slni_module_forward.1} parent=1 // pred_check_branch
      %27 = sbr.rel (0) target = $region25
    $region24: #{slni_module_forward.1} parent=1 // pred_region
      _
    $region25: #{slni_module_forward.1} parent=1 // pred_fallthru
      _
    // Predicated region
    $region26: #{slni_module_forward.1} parent=1 // pred_check
      _
    $region27: #{slni_module_forward.1} parent=1 // pred_check_branch
      %29 = sbr.rel (0) target = $region29
    $region28: #{slni_module_forward.1} parent=1 // pred_region
      _
    $region29: #{slni_module_forward.1} parent=1 // pred_fallthru
      _
    %v30 = vld [vmem:[%s0] sm:$0xff]
    %v31 = vld [vmem:[%s0 + $0x8] sm:$0xff]
    %v32 = vld [vmem:[%s0 + $0x10] sm:$0xff]
    %v33 = vld [vmem:[%s0 + $0x18] sm:$0xff]
    %v34 = vlaneseq
    %v35 = vshrl.u32 %v34, 7
    %v36 = vadd.s32 %v35, 8
    %v37 = vadd.s32 %v35, 16
    %v38 = vadd.s32 %v35, 24
    %vm39 = vcmp.ge.s32.totalorder %v35, 2
    %vm40 = vcmp.ge.s32.totalorder %v36, 2
    %vm41 = vcmp.ge.s32.totalorder %v37, 2
    %vm42 = vcmp.ge.s32.totalorder %v38, 2
    %v43 = vrot.slane %v30, 6
    %v44 = vrot.slane %v31, 6
    %v45 = vrot.slane %v32, 6
    %v46 = vrot.slane %v33, 6
    %vm47 = vcmp.lt.s32.totalorder %v35, 2
    %v48 = vsel %vm47, %v45, %v46
    %v49 = vsel %vm47, %v44, %v45
    %v50 = vsel %vm47, %v43, %v44
    %v51 = vsel %vm47, %v46, %v43
    %v52 = vsel %vm39, %v51, 0.0
    %v53 = vsel %vm40, %v50, 0.0
    %v54 = vsel %vm41, %v49, 0.0
    %v55 = vsel %vm42, %v48, 0.0
    %vm56 = vcmp.lt.s32.totalorder %v35, 30
    %vm57 = vcmp.lt.s32.totalorder %v36, 30
    %vm58 = vcmp.lt.s32.totalorder %v37, 30
    %vm59 = vcmp.lt.s32.totalorder %v38, 30
    %v60 = vrot.slane %v30, 2
    %v61 = vrot.slane %v31, 2
    %v62 = vrot.slane %v32, 2
    %v63 = vrot.slane %v33, 2
    %vm64 = vcmp.lt.s32.totalorder %v35, 6
    %v65 = vsel %vm64, %v62, %v63
    %v66 = vsel %vm64, %v61, %v62
    %v67 = vsel %vm64, %v60, %v61
    %v68 = vsel %vm64, %v63, %v60
    %v69 = vsel %vm56, %v67, 0.0
    %v70 = vsel %vm57, %v66, 0.0
    %v71 = vsel %vm58, %v65, 0.0
    %v72 = vsel %vm59, %v68, 0.0
    %77 = vrot.lane.b32.xlu0 %v30, 64
    %v78 = vpop.permute.xlu0 %77
    %79 = vrot.lane.b32.xlu0 %v31, 64
    %v80 = vpop.permute.xlu0 %79
    %81 = vrot.lane.b32.xlu0 %v32, 64
    %v82 = vpop.permute.xlu0 %81
    %83 = vrot.lane.b32.xlu0 %v33, 64
    %v84 = vpop.permute.xlu0 %83
    %vm89 = vcmask 523264
    %v90 = vsel %vm89, %v52, %v78
    %v91 = vsel %vm89, %v53, %v80
    %v92 = vsel %vm89, %v54, %v82
    %v93 = vsel %vm89, %v55, %v84
    %v94 = vld [vmem:[%s1] sm:$0xff]
    %v95 = vld [vmem:[%s1 + $0x8] sm:$0xff]
    %v96 = vld [vmem:[%s1 + $0x10] sm:$0xff]
    %v97 = vld [vmem:[%s1 + $0x18] sm:$0xff]
    %v98 = vld [vmem:[%s1 + $0x20] sm:$0xff]
    %v99 = vld [vmem:[%s1 + $0x28] sm:$0xff]
    %v100 = vld [vmem:[%s1 + $0x30] sm:$0xff]
    %v101 = vld [vmem:[%s1 + $0x38] sm:$0xff]
    %v102 = vld [vmem:[%s1 + $0x40] sm:$0xff]
    %v103 = vld [vmem:[%s1 + $0x48] sm:$0xff]
    %v104 = vld [vmem:[%s1 + $0x50] sm:$0xff]
    %v105 = vld [vmem:[%s1 + $0x58] sm:$0xff]
    %v106 = vld [vmem:[%s1 + $0x60] sm:$0xff]
    %v107 = vld [vmem:[%s1 + $0x68] sm:$0xff]
    %v108 = vld [vmem:[%s1 + $0x70] sm:$0xff]
    %v109 = vld [vmem:[%s1 + $0x78] sm:$0xff]
    %v110 = vld [vmem:[%s1 + $0x80] sm:$0xff]
    %v111 = vld [vmem:[%s1 + $0x88] sm:$0xff]
    %v112 = vld [vmem:[%s1 + $0x90] sm:$0xff]
    %v113 = vld [vmem:[%s1 + $0x98] sm:$0xff]
    %v114 = vld [vmem:[%s1 + $0xa0] sm:$0xff]
    %v115 = vld [vmem:[%s1 + $0xa8] sm:$0xff]
    %v116 = vld [vmem:[%s1 + $0xb0] sm:$0xff]
    %v117 = vld [vmem:[%s1 + $0xb8] sm:$0xff]
    %v118 = vld [vmem:[%s2] sm:$0x1]
    %v120 = vlaneseq
    %v121 = vshrl.u32 %v120, 7
    %v122 = vsub.s32 0, %v121
    %v123 = vrot.slane %v118, %v122
    %v126 = vsel %vm89, %v69, 0
    %v129 = vsel %vm89, %v70, 0
    %v132 = vsel %vm89, %v71, 0
    %v135 = vsel %vm89, %v72, 0
    %137 = vmatprep.subr.mxu0 0.0
    %138 = vmatpush1.msra.mxu0 %v94
    %139 = vmatprep.subr.mxu0 0.0
    %140 = vmatpush1.msra.mxu0 %v95
    %141 = vmatprep.subr.mxu0 0.0
    %142 = vmatpush1.msra.mxu0 %v96
    %143 = vmatprep.subr.mxu0 0.0
    %144 = vmatpush1.msra.mxu0 %v97
    %145 = vmatprep.subr.mxu0 0.0
    %146 = vmatpush1.msra.mxu0 %v98
    %147 = vmatprep.subr.mxu0 0.0
    %148 = vmatpush1.msra.mxu0 %v99
    %149 = vmatprep.subr.mxu0 0.0
    %150 = vmatpush1.msra.mxu0 %v100
    %151 = vmatprep.subr.mxu0 0.0
    %152 = vmatpush1.msra.mxu0 %v101
    %153 = vmatprep.subr.mxu0 0.0
    %154 = vmatpush1.msra.mxu0 %v102
    %155 = vmatprep.subr.mxu0 0.0
    %156 = vmatpush1.msra.mxu0 %v103
    %157 = vmatprep.subr.mxu0 0.0
    %158 = vmatpush1.msra.mxu0 %v104
    %159 = vmatprep.subr.mxu0 0.0
    %160 = vmatpush1.msra.mxu0 %v105
    %161 = vmatprep.subr.mxu0 0.0
    %162 = vmatpush1.msra.mxu0 %v106
    %163 = vmatprep.subr.mxu0 0.0
    %164 = vmatpush1.msra.mxu0 %v107
    %165 = vmatprep.subr.mxu0 0.0
    %166 = vmatpush1.msra.mxu0 %v108
    %167 = vmatprep.subr.mxu0 0.0
    %168 = vmatpush1.msra.mxu0 %v109
    %169 = vmatprep.subr.mxu0 0.0
    %170 = vmatpush1.msra.mxu0 %v110
    %171 = vmatprep.subr.mxu0 0.0
    %172 = vmatpush1.msra.mxu0 %v111
    %173 = vmatprep.subr.mxu0 0.0
    %174 = vmatpush1.msra.mxu0 %v112
    %175 = vmatprep.subr.mxu0 0.0
    %176 = vmatpush1.msra.mxu0 %v113
    %177 = vmatprep.subr.mxu0 0.0
    %178 = vmatpush1.msra.mxu0 %v114
    %179 = vmatprep.subr.mxu0 0.0
    %180 = vmatpush1.msra.mxu0 %v115
    %181 = vmatprep.subr.mxu0 0.0
    %182 = vmatpush1.msra.mxu0 %v116
    %183 = vmatprep.subr.mxu0 0.0
    %184 = vmatpush1.msra.mxu0 %v117
    %185 = vmatprep.subr.mxu0 0.0
    %186 = vmatpush1.msra.mxu0 0.0
    %187 = vmatprep.subr.mxu0 0.0
    %188 = vmatpush1.msra.mxu0 0.0
    %189 = vmatprep.subr.mxu0 0.0
    %190 = vmatpush1.msra.mxu0 0.0
    %191 = vmatprep.subr.mxu0 0.0
    %192 = vmatpush1.msra.mxu0 0.0
    %193 = vmatprep.subr.mxu0 0.0
    %194 = vmatpush1.msra.mxu0 0.0
    %195 = vmatprep.subr.mxu0 0.0
    %196 = vmatpush1.msra.mxu0 0.0
    %197 = vmatprep.subr.mxu0 0.0
    %198 = vmatpush1.msra.mxu0 0.0
    %199 = vmatprep.subr.mxu0 0.0
    %200 = vmatpush1.msra.mxu0 0.0
    %201 = vmatprep.mubr.f32.mxu0 %v126
    %202 = vmatmul.mubr.f32.gmra.mrb[0].mxu0 %v90
    %v203 = vpop.f32.mrb[0].mxu0
    %v204 = vadd.f32 %v123, %v203
    %v205 = vpop.f32.mrb[0].mxu0
    %206 = vmatprep.mubr.f32.mxu0 %v129
    %207 = vmatmul.mubr.f32.gmra.mrb[0].mxu0 %v91
    %v208 = vpop.f32.mrb[0].mxu0
    %v209 = vadd.f32 %v123, %v208
    %v210 = vpop.f32.mrb[0].mxu0
    %211 = vmatprep.mubr.f32.mxu0 %v132
    %212 = vmatmul.mubr.f32.gmra.mrb[0].mxu0 %v92
    %v213 = vpop.f32.mrb[0].mxu0
    %v214 = vadd.f32 %v123, %v213
    %v215 = vpop.f32.mrb[0].mxu0
    %216 = vmatprep.mubr.f32.mxu0 %v135
    %217 = vmatmul.mubr.f32.gmra.mrb[0].mxu0 %v93
    %v218 = vpop.f32.mrb[0].mxu0
    %v219 = vadd.f32 %v123, %v218
    %v220 = vpop.f32.mrb[0].mxu0
    %221 = vdwg.mxu0
    %v222 = vmax.f32 %v204, 0.0
    %v223 = vmax.f32 %v209, 0.0
    %v224 = vmax.f32 %v214, 0.0
    %v225 = vmax.f32 %v219, 0.0
    %226 = vst [vmem:[#allocation2] sm:$0x3] %v222
    %v229 = vunpack.c.l.s4 1983009808
    %v230 = vunpack.c.0.s8 %v229
    %v231 = vlaneseq
    %v232 = vshrl.u32 %v231, 7
    %v233 = vsub.s32 %v230, %v232
    %v234 = vrot.slane %v222, %v233
    %v235 = vcombine.high %v234, %v234
    %237 = vst [vmem:[#allocation2 + $0x2] sm:$0x3] %v235
    %v238 = vcombine.high %v222, %v222
    %v240 = vunpack.c.l.s4 1983009808
    %v241 = vunpack.c.0.s8 %v240
    %v242 = vlaneseq
    %v243 = vshrl.u32 %v242, 7
    %v244 = vsub.s32 %v241, %v243
    %v245 = vrot.slane %v238, %v244
    %247 = vst [vmem:[#allocation2 + $0x4] sm:$0x3] %v245
    %v248 = vcombine.high %v245, %v245
    %250 = vst [vmem:[#allocation2 + $0x6] sm:$0x3] %v248
    %251 = vst [vmem:[#allocation2 + $0x8] sm:$0x3] %v223
    %v254 = vunpack.c.l.s4 1983009808
    %v255 = vunpack.c.0.s8 %v254
    %v256 = vlaneseq
    %v257 = vshrl.u32 %v256, 7
    %v258 = vsub.s32 %v255, %v257
    %v259 = vrot.slane %v223, %v258
    %v260 = vcombine.high %v259, %v259
    %262 = vst [vmem:[#allocation2 + $0xa] sm:$0x3] %v260
    %v263 = vcombine.high %v223, %v223
    %v265 = vunpack.c.l.s4 1983009808
    %v266 = vunpack.c.0.s8 %v265
    %v267 = vlaneseq
    %v268 = vshrl.u32 %v267, 7
    %v269 = vsub.s32 %v266, %v268
    %v270 = vrot.slane %v263, %v269
    %272 = vst [vmem:[#allocation2 + $0xc] sm:$0x3] %v270
    %v273 = vcombine.high %v270, %v270
    %275 = vst [vmem:[#allocation2 + $0xe] sm:$0x3] %v273
    %276 = vst [vmem:[#allocation2 + $0x10] sm:$0x3] %v224
    %v279 = vunpack.c.l.s4 1983009808
    %v280 = vunpack.c.0.s8 %v279
    %v281 = vlaneseq
    %v282 = vshrl.u32 %v281, 7
    %v283 = vsub.s32 %v280, %v282
    %v284 = vrot.slane %v224, %v283
    %v285 = vcombine.high %v284, %v284
    %287 = vst [vmem:[#allocation2 + $0x12] sm:$0x3] %v285
    %v288 = vcombine.high %v224, %v224
    %v290 = vunpack.c.l.s4 1983009808
    %v291 = vunpack.c.0.s8 %v290
    %v292 = vlaneseq
    %v293 = vshrl.u32 %v292, 7
    %v294 = vsub.s32 %v291, %v293
    %v295 = vrot.slane %v288, %v294
    %297 = vst [vmem:[#allocation2 + $0x14] sm:$0x3] %v295
    %v298 = vcombine.high %v295, %v295
    %300 = vst [vmem:[#allocation2 + $0x16] sm:$0x3] %v298
    %301 = vst [vmem:[#allocation2 + $0x18] sm:$0x3] %v225
    %v304 = vunpack.c.l.s4 1983009808
    %v305 = vunpack.c.0.s8 %v304
    %v306 = vlaneseq
    %v307 = vshrl.u32 %v306, 7
    %v308 = vsub.s32 %v305, %v307
    %v309 = vrot.slane %v225, %v308
    %v310 = vcombine.high %v309, %v309
    %312 = vst [vmem:[#allocation2 + $0x1a] sm:$0x3] %v310
    %v313 = vcombine.high %v225, %v225
    %v315 = vunpack.c.l.s4 1983009808
    %v316 = vunpack.c.0.s8 %v315
    %v317 = vlaneseq
    %v318 = vshrl.u32 %v317, 7
    %v319 = vsub.s32 %v316, %v318
    %v320 = vrot.slane %v313, %v319
    %322 = vst [vmem:[#allocation2 + $0x1c] sm:$0x3] %v320
    %v323 = vcombine.high %v320, %v320
    %325 = vst [vmem:[#allocation2 + $0x1e] sm:$0x3] %v323
    %v326 = vld [vmem:[#allocation2] sm:$0xff]
    %v327 = vld [vmem:[#allocation2 + $0x8] sm:$0xff]
    %v328 = vld [vmem:[#allocation2 + $0x10] sm:$0xff]
    %v329 = vld [vmem:[#allocation2 + $0x18] sm:$0xff]
    %v330 = vld [vmem:[%s3] sm:$0xff]
    %v331 = vld [vmem:[%s3 + $0x8] sm:$0xff]
    %v332 = vld [vmem:[%s3 + $0x10] sm:$0xff]
    %v333 = vld [vmem:[%s3 + $0x18] sm:$0xff]
    %v334 = vld [vmem:[%s3 + $0x20] sm:$0xff]
    %v335 = vld [vmem:[%s3 + $0x28] sm:$0xff]
    %v336 = vld [vmem:[%s3 + $0x30] sm:$0xff]
    %v337 = vld [vmem:[%s3 + $0x38] sm:$0xff]
    %v338 = vld [vmem:[%s3 + $0x40] sm:$0xff]
    %v339 = vld [vmem:[%s3 + $0x48] sm:$0xff]
    %v340 = vld [vmem:[%s3 + $0x50] sm:$0xff]
    %v341 = vld [vmem:[%s3 + $0x58] sm:$0xff]
    %v342 = vld [vmem:[%s3 + $0x60] sm:$0xff]
    %v343 = vld [vmem:[%s3 + $0x68] sm:$0xff]
    %v344 = vld [vmem:[%s3 + $0x70] sm:$0xff]
    %v345 = vld [vmem:[%s3 + $0x78] sm:$0xff]
    %v346 = vld [vmem:[%s3 + $0x80] sm:$0xff]
    %v347 = vld [vmem:[%s3 + $0x88] sm:$0xff]
    %v348 = vld [vmem:[%s3 + $0x90] sm:$0xff]
    %v349 = vld [vmem:[%s3 + $0x98] sm:$0xff]
    %v350 = vld [vmem:[%s3 + $0xa0] sm:$0xff]
    %v351 = vld [vmem:[%s3 + $0xa8] sm:$0xff]
    %v352 = vld [vmem:[%s3 + $0xb0] sm:$0xff]
    %v353 = vld [vmem:[%s3 + $0xb8] sm:$0xff]
    %v354 = vld [vmem:[%s3 + $0xc0] sm:$0xff]
    %v355 = vld [vmem:[%s3 + $0xc8] sm:$0xff]
    %v356 = vld [vmem:[%s3 + $0xd0] sm:$0xff]
    %v357 = vld [vmem:[%s3 + $0xd8] sm:$0xff]
    %v358 = vld [vmem:[%s3 + $0xe0] sm:$0xff]
    %v359 = vld [vmem:[%s3 + $0xe8] sm:$0xff]
    %v360 = vld [vmem:[%s3 + $0xf0] sm:$0xff]
    %v361 = vld [vmem:[%s3 + $0xf8] sm:$0xff]
    %v362 = vld [vmem:[%s3 + $0x100] sm:$0xff]
    %v363 = vld [vmem:[%s3 + $0x108] sm:$0xff]
    %v364 = vld [vmem:[%s3 + $0x110] sm:$0xff]
    %v365 = vld [vmem:[%s3 + $0x118] sm:$0xff]
    %v366 = vld [vmem:[%s3 + $0x120] sm:$0xff]
    %v367 = vld [vmem:[%s3 + $0x128] sm:$0xff]
    %v368 = vld [vmem:[%s3 + $0x130] sm:$0xff]
    %v369 = vld [vmem:[%s3 + $0x138] sm:$0xff]
    %v370 = vld [vmem:[%s3 + $0x140] sm:$0xff]
    %v371 = vld [vmem:[%s3 + $0x148] sm:$0xff]
    %v372 = vld [vmem:[%s3 + $0x150] sm:$0xff]
    %v373 = vld [vmem:[%s3 + $0x158] sm:$0xff]
    %v374 = vld [vmem:[%s3 + $0x160] sm:$0xff]
    %v375 = vld [vmem:[%s3 + $0x168] sm:$0xff]
    %v376 = vld [vmem:[%s3 + $0x170] sm:$0xff]
    %v377 = vld [vmem:[%s3 + $0x178] sm:$0xff]
    %v378 = vld [vmem:[%s3 + $0x180] sm:$0xff]
    %v379 = vld [vmem:[%s3 + $0x188] sm:$0xff]
    %v380 = vld [vmem:[%s3 + $0x190] sm:$0xff]
    %v381 = vld [vmem:[%s3 + $0x198] sm:$0xff]
    %v382 = vld [vmem:[%s3 + $0x1a0] sm:$0xff]
    %v383 = vld [vmem:[%s3 + $0x1a8] sm:$0xff]
    %v384 = vld [vmem:[%s3 + $0x1b0] sm:$0xff]
    %v385 = vld [vmem:[%s3 + $0x1b8] sm:$0xff]
    %v386 = vld [vmem:[%s3 + $0x1c0] sm:$0xff]
    %v387 = vld [vmem:[%s3 + $0x1c8] sm:$0xff]
    %v388 = vld [vmem:[%s3 + $0x1d0] sm:$0xff]
    %v389 = vld [vmem:[%s3 + $0x1d8] sm:$0xff]
    %v390 = vld [vmem:[%s3 + $0x1e0] sm:$0xff]
    %v391 = vld [vmem:[%s3 + $0x1e8] sm:$0xff]
    %v392 = vld [vmem:[%s3 + $0x1f0] sm:$0xff]
    %v393 = vld [vmem:[%s3 + $0x1f8] sm:$0xff]
    %v394 = vld [vmem:[%s3 + $0x200] sm:$0xff]
    %v395 = vld [vmem:[%s3 + $0x208] sm:$0xff]
    %v396 = vld [vmem:[%s3 + $0x210] sm:$0xff]
    %v397 = vld [vmem:[%s3 + $0x218] sm:$0xff]
    %v398 = vld [vmem:[%s3 + $0x220] sm:$0xff]
    %v399 = vld [vmem:[%s3 + $0x228] sm:$0xff]
    %v400 = vld [vmem:[%s3 + $0x230] sm:$0xff]
    %v401 = vld [vmem:[%s3 + $0x238] sm:$0xff]
    %v402 = vld [vmem:[%s3 + $0x240] sm:$0xff]
    %v403 = vld [vmem:[%s3 + $0x248] sm:$0xff]
    %v404 = vld [vmem:[%s3 + $0x250] sm:$0xff]
    %v405 = vld [vmem:[%s3 + $0x258] sm:$0xff]
    %v406 = vld [vmem:[%s3 + $0x260] sm:$0xff]
    %v407 = vld [vmem:[%s3 + $0x268] sm:$0xff]
    %v408 = vld [vmem:[%s3 + $0x270] sm:$0xff]
    %v409 = vld [vmem:[%s3 + $0x278] sm:$0xff]
    %v410 = vld [vmem:[%s3 + $0x280] sm:$0xff]
    %v411 = vld [vmem:[%s3 + $0x288] sm:$0xff]
    %v412 = vld [vmem:[%s3 + $0x290] sm:$0xff]
    %v413 = vld [vmem:[%s3 + $0x298] sm:$0xff]
    %v414 = vld [vmem:[%s3 + $0x2a0] sm:$0xff]
    %v415 = vld [vmem:[%s3 + $0x2a8] sm:$0xff]
    %v416 = vld [vmem:[%s3 + $0x2b0] sm:$0xff]
    %v417 = vld [vmem:[%s3 + $0x2b8] sm:$0xff]
    %v418 = vld [vmem:[%s3 + $0x2c0] sm:$0xff]
    %v419 = vld [vmem:[%s3 + $0x2c8] sm:$0xff]
    %v420 = vld [vmem:[%s3 + $0x2d0] sm:$0xff]
    %v421 = vld [vmem:[%s3 + $0x2d8] sm:$0xff]
    %v422 = vld [vmem:[%s3 + $0x2e0] sm:$0xff]
    %v423 = vld [vmem:[%s3 + $0x2e8] sm:$0xff]
    %v424 = vld [vmem:[%s3 + $0x2f0] sm:$0xff]
    %v425 = vld [vmem:[%s3 + $0x2f8] sm:$0xff]
    %v426 = vld [vmem:[%s3 + $0x300] sm:$0xff]
    %v427 = vld [vmem:[%s3 + $0x308] sm:$0xff]
    %v428 = vld [vmem:[%s3 + $0x310] sm:$0xff]
    %v429 = vld [vmem:[%s3 + $0x318] sm:$0xff]
    %v430 = vld [vmem:[%s3 + $0x320] sm:$0xff]
    %v431 = vld [vmem:[%s3 + $0x328] sm:$0xff]
    %v432 = vld [vmem:[%s3 + $0x330] sm:$0xff]
    %v433 = vld [vmem:[%s3 + $0x338] sm:$0xff]
    %v434 = vld [vmem:[%s3 + $0x340] sm:$0xff]
    %v435 = vld [vmem:[%s3 + $0x348] sm:$0xff]
    %v436 = vld [vmem:[%s3 + $0x350] sm:$0xff]
    %v437 = vld [vmem:[%s3 + $0x358] sm:$0xff]
    %v438 = vld [vmem:[%s3 + $0x360] sm:$0xff]
    %v439 = vld [vmem:[%s3 + $0x368] sm:$0xff]
    %v440 = vld [vmem:[%s3 + $0x370] sm:$0xff]
    %v441 = vld [vmem:[%s3 + $0x378] sm:$0xff]
    %v442 = vld [vmem:[%s3 + $0x380] sm:$0xff]
    %v443 = vld [vmem:[%s3 + $0x388] sm:$0xff]
    %v444 = vld [vmem:[%s3 + $0x390] sm:$0xff]
    %v445 = vld [vmem:[%s3 + $0x398] sm:$0xff]
    %v446 = vld [vmem:[%s3 + $0x3a0] sm:$0xff]
    %v447 = vld [vmem:[%s3 + $0x3a8] sm:$0xff]
    %v448 = vld [vmem:[%s3 + $0x3b0] sm:$0xff]
    %v449 = vld [vmem:[%s3 + $0x3b8] sm:$0xff]
    %v450 = vld [vmem:[%s3 + $0x3c0] sm:$0xff]
    %v451 = vld [vmem:[%s3 + $0x3c8] sm:$0xff]
    %v452 = vld [vmem:[%s3 + $0x3d0] sm:$0xff]
    %v453 = vld [vmem:[%s3 + $0x3d8] sm:$0xff]
    %v454 = vld [vmem:[%s3 + $0x3e0] sm:$0xff]
    %v455 = vld [vmem:[%s3 + $0x3e8] sm:$0xff]
    %v456 = vld [vmem:[%s3 + $0x3f0] sm:$0xff]
    %v457 = vld [vmem:[%s3 + $0x3f8] sm:$0xff]
    %v458 = vld [vmem:[%s3 + $0x400] sm:$0xff]
    %v459 = vld [vmem:[%s3 + $0x408] sm:$0xff]
    %v460 = vld [vmem:[%s3 + $0x410] sm:$0xff]
    %v461 = vld [vmem:[%s3 + $0x418] sm:$0xff]
    %v462 = vld [vmem:[%s3 + $0x420] sm:$0xff]
    %v463 = vld [vmem:[%s3 + $0x428] sm:$0xff]
    %v464 = vld [vmem:[%s3 + $0x430] sm:$0xff]
    %v465 = vld [vmem:[%s3 + $0x438] sm:$0xff]
    %v466 = vld [vmem:[%s3 + $0x440] sm:$0xff]
    %v467 = vld [vmem:[%s3 + $0x448] sm:$0xff]
    %v468 = vld [vmem:[%s3 + $0x450] sm:$0xff]
    %v469 = vld [vmem:[%s3 + $0x458] sm:$0xff]
    %v470 = vld [vmem:[%s3 + $0x460] sm:$0xff]
    %v471 = vld [vmem:[%s3 + $0x468] sm:$0xff]
    %v472 = vld [vmem:[%s3 + $0x470] sm:$0xff]
    %v473 = vld [vmem:[%s3 + $0x478] sm:$0xff]
    %v474 = vld [vmem:[%s3 + $0x480] sm:$0xff]
    %v475 = vld [vmem:[%s3 + $0x488] sm:$0xff]
    %v476 = vld [vmem:[%s3 + $0x490] sm:$0xff]
    %v477 = vld [vmem:[%s3 + $0x498] sm:$0xff]
    %v478 = vld [vmem:[%s3 + $0x4a0] sm:$0xff]
    %v479 = vld [vmem:[%s3 + $0x4a8] sm:$0xff]
    %v480 = vld [vmem:[%s3 + $0x4b0] sm:$0xff]
    %v481 = vld [vmem:[%s3 + $0x4b8] sm:$0xff]
    %v482 = vld [vmem:[%s3 + $0x4c0] sm:$0xff]
    %v483 = vld [vmem:[%s3 + $0x4c8] sm:$0xff]
    %v484 = vld [vmem:[%s3 + $0x4d0] sm:$0xff]
    %v485 = vld [vmem:[%s3 + $0x4d8] sm:$0xff]
    %v486 = vld [vmem:[%s3 + $0x4e0] sm:$0xff]
    %v487 = vld [vmem:[%s3 + $0x4e8] sm:$0xff]
    %v488 = vld [vmem:[%s3 + $0x4f0] sm:$0xff]
    %v489 = vld [vmem:[%s3 + $0x4f8] sm:$0xff]
    %v490 = vld [vmem:[%s3 + $0x500] sm:$0xff]
    %v491 = vld [vmem:[%s3 + $0x508] sm:$0xff]
    %v492 = vld [vmem:[%s3 + $0x510] sm:$0xff]
    %v493 = vld [vmem:[%s3 + $0x518] sm:$0xff]
    %v494 = vld [vmem:[%s3 + $0x520] sm:$0xff]
    %v495 = vld [vmem:[%s3 + $0x528] sm:$0xff]
    %v496 = vld [vmem:[%s3 + $0x530] sm:$0xff]
    %v497 = vld [vmem:[%s3 + $0x538] sm:$0xff]
    %v498 = vld [vmem:[%s3 + $0x540] sm:$0xff]
    %v499 = vld [vmem:[%s3 + $0x548] sm:$0xff]
    %v500 = vld [vmem:[%s3 + $0x550] sm:$0xff]
    %v501 = vld [vmem:[%s3 + $0x558] sm:$0xff]
    %v502 = vld [vmem:[%s3 + $0x560] sm:$0xff]
    %v503 = vld [vmem:[%s3 + $0x568] sm:$0xff]
    %v504 = vld [vmem:[%s3 + $0x570] sm:$0xff]
    %v505 = vld [vmem:[%s3 + $0x578] sm:$0xff]
    %v506 = vld [vmem:[%s3 + $0x580] sm:$0xff]
    %v507 = vld [vmem:[%s3 + $0x588] sm:$0xff]
    %v508 = vld [vmem:[%s3 + $0x590] sm:$0xff]
    %v509 = vld [vmem:[%s3 + $0x598] sm:$0xff]
    %v510 = vld [vmem:[%s3 + $0x5a0] sm:$0xff]
    %v511 = vld [vmem:[%s3 + $0x5a8] sm:$0xff]
    %v512 = vld [vmem:[%s3 + $0x5b0] sm:$0xff]
    %v513 = vld [vmem:[%s3 + $0x5b8] sm:$0xff]
    %v514 = vld [vmem:[%s3 + $0x5c0] sm:$0xff]
    %v515 = vld [vmem:[%s3 + $0x5c8] sm:$0xff]
    %v516 = vld [vmem:[%s3 + $0x5d0] sm:$0xff]
    %v517 = vld [vmem:[%s3 + $0x5d8] sm:$0xff]
    %v518 = vld [vmem:[%s3 + $0x5e0] sm:$0xff]
    %v519 = vld [vmem:[%s3 + $0x5e8] sm:$0xff]
    %v520 = vld [vmem:[%s3 + $0x5f0] sm:$0xff]
    %v521 = vld [vmem:[%s3 + $0x5f8] sm:$0xff]
    %v522 = vld [vmem:[%s3 + $0x600] sm:$0xff]
    %v523 = vld [vmem:[%s3 + $0x608] sm:$0xff]
    %v524 = vld [vmem:[%s3 + $0x610] sm:$0xff]
    %v525 = vld [vmem:[%s3 + $0x618] sm:$0xff]
    %v526 = vld [vmem:[%s3 + $0x620] sm:$0xff]
    %v527 = vld [vmem:[%s3 + $0x628] sm:$0xff]
    %v528 = vld [vmem:[%s3 + $0x630] sm:$0xff]
    %v529 = vld [vmem:[%s3 + $0x638] sm:$0xff]
    %v530 = vld [vmem:[%s3 + $0x640] sm:$0xff]
    %v531 = vld [vmem:[%s3 + $0x648] sm:$0xff]
    %v532 = vld [vmem:[%s3 + $0x650] sm:$0xff]
    %v533 = vld [vmem:[%s3 + $0x658] sm:$0xff]
    %v534 = vld [vmem:[%s3 + $0x660] sm:$0xff]
    %v535 = vld [vmem:[%s3 + $0x668] sm:$0xff]
    %v536 = vld [vmem:[%s3 + $0x670] sm:$0xff]
    %v537 = vld [vmem:[%s3 + $0x678] sm:$0xff]
    %v538 = vld [vmem:[%s3 + $0x680] sm:$0xff]
    %v539 = vld [vmem:[%s3 + $0x688] sm:$0xff]
    %v540 = vld [vmem:[%s3 + $0x690] sm:$0xff]
    %v541 = vld [vmem:[%s3 + $0x698] sm:$0xff]
    %v542 = vld [vmem:[%s3 + $0x6a0] sm:$0xff]
    %v543 = vld [vmem:[%s3 + $0x6a8] sm:$0xff]
    %v544 = vld [vmem:[%s3 + $0x6b0] sm:$0xff]
    %v545 = vld [vmem:[%s3 + $0x6b8] sm:$0xff]
    %v546 = vld [vmem:[%s3 + $0x6c0] sm:$0xff]
    %v547 = vld [vmem:[%s3 + $0x6c8] sm:$0xff]
    %v548 = vld [vmem:[%s3 + $0x6d0] sm:$0xff]
    %v549 = vld [vmem:[%s3 + $0x6d8] sm:$0xff]
    %v550 = vld [vmem:[%s3 + $0x6e0] sm:$0xff]
    %v551 = vld [vmem:[%s3 + $0x6e8] sm:$0xff]
    %v552 = vld [vmem:[%s3 + $0x6f0] sm:$0xff]
    %v553 = vld [vmem:[%s3 + $0x6f8] sm:$0xff]
    %v554 = vld [vmem:[%s3 + $0x700] sm:$0xff]
    %v555 = vld [vmem:[%s3 + $0x708] sm:$0xff]
    %v556 = vld [vmem:[%s3 + $0x710] sm:$0xff]
    %v557 = vld [vmem:[%s3 + $0x718] sm:$0xff]
    %v558 = vld [vmem:[%s3 + $0x720] sm:$0xff]
    %v559 = vld [vmem:[%s3 + $0x728] sm:$0xff]
    %v560 = vld [vmem:[%s3 + $0x730] sm:$0xff]
    %v561 = vld [vmem:[%s3 + $0x738] sm:$0xff]
    %v562 = vld [vmem:[%s3 + $0x740] sm:$0xff]
    %v563 = vld [vmem:[%s3 + $0x748] sm:$0xff]
    %v564 = vld [vmem:[%s3 + $0x750] sm:$0xff]
    %v565 = vld [vmem:[%s3 + $0x758] sm:$0xff]
    %v566 = vld [vmem:[%s3 + $0x760] sm:$0xff]
    %v567 = vld [vmem:[%s3 + $0x768] sm:$0xff]
    %v568 = vld [vmem:[%s3 + $0x770] sm:$0xff]
    %v569 = vld [vmem:[%s3 + $0x778] sm:$0xff]
    %v570 = vld [vmem:[%s3 + $0x780] sm:$0xff]
    %v571 = vld [vmem:[%s3 + $0x788] sm:$0xff]
    %v572 = vld [vmem:[%s3 + $0x790] sm:$0xff]
    %v573 = vld [vmem:[%s3 + $0x798] sm:$0xff]
    %v574 = vld [vmem:[%s3 + $0x7a0] sm:$0xff]
    %v575 = vld [vmem:[%s3 + $0x7a8] sm:$0xff]
    %v576 = vld [vmem:[%s3 + $0x7b0] sm:$0xff]
    %v577 = vld [vmem:[%s3 + $0x7b8] sm:$0xff]
    %v578 = vld [vmem:[%s3 + $0x7c0] sm:$0xff]
    %v579 = vld [vmem:[%s3 + $0x7c8] sm:$0xff]
    %v580 = vld [vmem:[%s3 + $0x7d0] sm:$0xff]
    %v581 = vld [vmem:[%s3 + $0x7d8] sm:$0xff]
    %v582 = vld [vmem:[%s3 + $0x7e0] sm:$0xff]
    %v583 = vld [vmem:[%s3 + $0x7e8] sm:$0xff]
    %v584 = vld [vmem:[%s3 + $0x7f0] sm:$0xff]
    %v585 = vld [vmem:[%s3 + $0x7f8] sm:$0xff]
    %v586 = vld [vmem:[%s4] sm:$0x1]
    %v588 = vlaneseq
    %v589 = vshrl.u32 %v588, 7
    %v590 = vsub.s32 0, %v589
    %v591 = vrot.slane %v586, %v590
    %v597 = vcombine.high %v326, %v326
    %v599 = vunpack.c.l.s4 1983009808
    %v600 = vunpack.c.0.s8 %v599
    %v601 = vlaneseq
    %v602 = vshrl.u32 %v601, 7
    %v603 = vsub.s32 %v600, %v602
    %v604 = vrot.slane %v326, %v603
    %v606 = vunpack.c.l.s4 1983009808
    %v607 = vunpack.c.0.s8 %v606
    %v608 = vlaneseq
    %v609 = vshrl.u32 %v608, 7
    %v610 = vsub.s32 %v607, %v609
    %v611 = vrot.slane %v597, %v610
    %v612 = vcombine.high %v604, %v604
    %v613 = vcombine.high %v611, %v611
    %v614 = vcombine.high %v327, %v327
    %v616 = vunpack.c.l.s4 1983009808
    %v617 = vunpack.c.0.s8 %v616
    %v618 = vlaneseq
    %v619 = vshrl.u32 %v618, 7
    %v620 = vsub.s32 %v617, %v619
    %v621 = vrot.slane %v327, %v620
    %v623 = vunpack.c.l.s4 1983009808
    %v624 = vunpack.c.0.s8 %v623
    %v625 = vlaneseq
    %v626 = vshrl.u32 %v625, 7
    %v627 = vsub.s32 %v624, %v626
    %v628 = vrot.slane %v614, %v627
    %v629 = vcombine.high %v621, %v621
    %v630 = vcombine.high %v628, %v628
    %v631 = vcombine.high %v328, %v328
    %v633 = vunpack.c.l.s4 1983009808
    %v634 = vunpack.c.0.s8 %v633
    %v635 = vlaneseq
    %v636 = vshrl.u32 %v635, 7
    %v637 = vsub.s32 %v634, %v636
    %v638 = vrot.slane %v328, %v637
    %v640 = vunpack.c.l.s4 1983009808
    %v641 = vunpack.c.0.s8 %v640
    %v642 = vlaneseq
    %v643 = vshrl.u32 %v642, 7
    %v644 = vsub.s32 %v641, %v643
    %v645 = vrot.slane %v631, %v644
    %v646 = vcombine.high %v638, %v638
    %v647 = vcombine.high %v645, %v645
    %v648 = vcombine.high %v329, %v329
    %v650 = vunpack.c.l.s4 1983009808
    %v651 = vunpack.c.0.s8 %v650
    %v652 = vlaneseq
    %v653 = vshrl.u32 %v652, 7
    %v654 = vsub.s32 %v651, %v653
    %v655 = vrot.slane %v329, %v654
    %v657 = vunpack.c.l.s4 1983009808
    %v658 = vunpack.c.0.s8 %v657
    %v659 = vlaneseq
    %v660 = vshrl.u32 %v659, 7
    %v661 = vsub.s32 %v658, %v660
    %v662 = vrot.slane %v648, %v661
    %v663 = vcombine.high %v655, %v655
    %v664 = vcombine.high %v662, %v662
    %681 = vmatprep.subr.mxu0 0.0
    %682 = vmatpush1.msra.mxu0 %v330
    %683 = vmatprep.subr.mxu0 0.0
    %684 = vmatpush1.msra.mxu0 %v331
    %685 = vmatprep.subr.mxu0 0.0
    %686 = vmatpush1.msra.mxu0 %v332
    %687 = vmatprep.subr.mxu0 0.0
    %688 = vmatpush1.msra.mxu0 %v333
    %689 = vmatprep.subr.mxu0 0.0
    %690 = vmatpush1.msra.mxu0 %v334
    %691 = vmatprep.subr.mxu0 0.0
    %692 = vmatpush1.msra.mxu0 %v335
    %693 = vmatprep.subr.mxu0 0.0
    %694 = vmatpush1.msra.mxu0 %v336
    %695 = vmatprep.subr.mxu0 0.0
    %696 = vmatpush1.msra.mxu0 %v337
    %697 = vmatprep.subr.mxu0 0.0
    %698 = vmatpush1.msra.mxu0 %v338
    %699 = vmatprep.subr.mxu0 0.0
    %700 = vmatpush1.msra.mxu0 %v339
    %701 = vmatprep.subr.mxu0 0.0
    %702 = vmatpush1.msra.mxu0 %v340
    %703 = vmatprep.subr.mxu0 0.0
    %704 = vmatpush1.msra.mxu0 %v341
    %705 = vmatprep.subr.mxu0 0.0
    %706 = vmatpush1.msra.mxu0 %v342
    %707 = vmatprep.subr.mxu0 0.0
    %708 = vmatpush1.msra.mxu0 %v343
    %709 = vmatprep.subr.mxu0 0.0
    %710 = vmatpush1.msra.mxu0 %v344
    %711 = vmatprep.subr.mxu0 0.0
    %712 = vmatpush1.msra.mxu0 %v345
    %713 = vmatprep.subr.mxu0 0.0
    %714 = vmatpush1.msra.mxu0 %v346
    %715 = vmatprep.subr.mxu0 0.0
    %716 = vmatpush1.msra.mxu0 %v347
    %717 = vmatprep.subr.mxu0 0.0
    %718 = vmatpush1.msra.mxu0 %v348
    %719 = vmatprep.subr.mxu0 0.0
    %720 = vmatpush1.msra.mxu0 %v349
    %721 = vmatprep.subr.mxu0 0.0
    %722 = vmatpush1.msra.mxu0 %v350
    %723 = vmatprep.subr.mxu0 0.0
    %724 = vmatpush1.msra.mxu0 %v351
    %725 = vmatprep.subr.mxu0 0.0
    %726 = vmatpush1.msra.mxu0 %v352
    %727 = vmatprep.subr.mxu0 0.0
    %728 = vmatpush1.msra.mxu0 %v353
    %729 = vmatprep.subr.mxu0 0.0
    %730 = vmatpush1.msra.mxu0 %v354
    %731 = vmatprep.subr.mxu0 0.0
    %732 = vmatpush1.msra.mxu0 %v355
    %733 = vmatprep.subr.mxu0 0.0
    %734 = vmatpush1.msra.mxu0 %v356
    %735 = vmatprep.subr.mxu0 0.0
    %736 = vmatpush1.msra.mxu0 %v357
    %737 = vmatprep.subr.mxu0 0.0
    %738 = vmatpush1.msra.mxu0 %v358
    %739 = vmatprep.subr.mxu0 0.0
    %740 = vmatpush1.msra.mxu0 %v359
    %741 = vmatprep.subr.mxu0 0.0
    %742 = vmatpush1.msra.mxu0 %v360
    %743 = vmatprep.subr.mxu0 0.0
    %744 = vmatpush1.msra.mxu0 %v361
    %745 = vmatprep.mubr.f32.mxu0 %v612
    %746 = vmatmul.mubr.f32.gmra.mrb[0].mxu0 %v604
    %v747 = vpop.f32.mrb[0].mxu0
    %v748 = vadd.f32 %v591, %v747
    %v749 = vpop.f32.mrb[0].mxu0
    %750 = vdwg.mxu0
    %751 = vmatprep.subr.mxu0 0.0
    %752 = vmatpush1.msra.mxu0 %v362
    %753 = vmatprep.subr.mxu0 0.0
    %754 = vmatpush1.msra.mxu0 %v363
    %755 = vmatprep.subr.mxu0 0.0
    %756 = vmatpush1.msra.mxu0 %v364
    %757 = vmatprep.subr.mxu0 0.0
    %758 = vmatpush1.msra.mxu0 %v365
    %759 = vmatprep.subr.mxu0 0.0
    %760 = vmatpush1.msra.mxu0 %v366
    %761 = vmatprep.subr.mxu0 0.0
    %762 = vmatpush1.msra.mxu0 %v367
    %763 = vmatprep.subr.mxu0 0.0
    %764 = vmatpush1.msra.mxu0 %v368
    %765 = vmatprep.subr.mxu0 0.0
    %766 = vmatpush1.msra.mxu0 %v369
    %767 = vmatprep.subr.mxu0 0.0
    %768 = vmatpush1.msra.mxu0 %v370
    %769 = vmatprep.subr.mxu0 0.0
    %770 = vmatpush1.msra.mxu0 %v371
    %771 = vmatprep.subr.mxu0 0.0
    %772 = vmatpush1.msra.mxu0 %v372
    %773 = vmatprep.subr.mxu0 0.0
    %774 = vmatpush1.msra.mxu0 %v373
    %775 = vmatprep.subr.mxu0 0.0
    %776 = vmatpush1.msra.mxu0 %v374
    %777 = vmatprep.subr.mxu0 0.0
    %778 = vmatpush1.msra.mxu0 %v375
    %779 = vmatprep.subr.mxu0 0.0
    %780 = vmatpush1.msra.mxu0 %v376
    %781 = vmatprep.subr.mxu0 0.0
    %782 = vmatpush1.msra.mxu0 %v377
    %783 = vmatprep.subr.mxu0 0.0
    %784 = vmatpush1.msra.mxu0 %v378
    %785 = vmatprep.subr.mxu0 0.0
    %786 = vmatpush1.msra.mxu0 %v379
    %787 = vmatprep.subr.mxu0 0.0
    %788 = vmatpush1.msra.mxu0 %v380
    %789 = vmatprep.subr.mxu0 0.0
    %790 = vmatpush1.msra.mxu0 %v381
    %791 = vmatprep.subr.mxu0 0.0
    %792 = vmatpush1.msra.mxu0 %v382
    %793 = vmatprep.subr.mxu0 0.0
    %794 = vmatpush1.msra.mxu0 %v383
    %795 = vmatprep.subr.mxu0 0.0
    %796 = vmatpush1.msra.mxu0 %v384
    %797 = vmatprep.subr.mxu0 0.0
    %798 = vmatpush1.msra.mxu0 %v385
    %799 = vmatprep.subr.mxu0 0.0
    %800 = vmatpush1.msra.mxu0 %v386
    %801 = vmatprep.subr.mxu0 0.0
    %802 = vmatpush1.msra.mxu0 %v387
    %803 = vmatprep.subr.mxu0 0.0
    %804 = vmatpush1.msra.mxu0 %v388
    %805 = vmatprep.subr.mxu0 0.0
    %806 = vmatpush1.msra.mxu0 %v389
    %807 = vmatprep.subr.mxu0 0.0
    %808 = vmatpush1.msra.mxu0 %v390
    %809 = vmatprep.subr.mxu0 0.0
    %810 = vmatpush1.msra.mxu0 %v391
    %811 = vmatprep.subr.mxu0 0.0
    %812 = vmatpush1.msra.mxu0 %v392
    %813 = vmatprep.subr.mxu0 0.0
    %814 = vmatpush1.msra.mxu0 %v393
    %815 = vmatprep.mubr.f32.mxu0 %v613
    %816 = vmatmul.mubr.f32.gmra.mrb[0].mxu0 %v611
    %v817 = vpop.f32.mrb[0].mxu0
    %v818 = vadd.f32 %v748, %v817
    %v819 = vpop.f32.mrb[0].mxu0
    %820 = vdwg.mxu0
    %821 = vmatprep.subr.mxu0 0.0
    %822 = vmatpush1.msra.mxu0 %v394
    %823 = vmatprep.subr.mxu0 0.0
    %824 = vmatpush1.msra.mxu0 %v395
    %825 = vmatprep.subr.mxu0 0.0
    %826 = vmatpush1.msra.mxu0 %v396
    %827 = vmatprep.subr.mxu0 0.0
    %828 = vmatpush1.msra.mxu0 %v397
    %829 = vmatprep.subr.mxu0 0.0
    %830 = vmatpush1.msra.mxu0 %v398
    %831 = vmatprep.subr.mxu0 0.0
    %832 = vmatpush1.msra.mxu0 %v399
    %833 = vmatprep.subr.mxu0 0.0
    %834 = vmatpush1.msra.mxu0 %v400
    %835 = vmatprep.subr.mxu0 0.0
    %836 = vmatpush1.msra.mxu0 %v401
    %837 = vmatprep.subr.mxu0 0.0
    %838 = vmatpush1.msra.mxu0 %v402
    %839 = vmatprep.subr.mxu0 0.0
    %840 = vmatpush1.msra.mxu0 %v403
    %841 = vmatprep.subr.mxu0 0.0
    %842 = vmatpush1.msra.mxu0 %v404
    %843 = vmatprep.subr.mxu0 0.0
    %844 = vmatpush1.msra.mxu0 %v405
    %845 = vmatprep.subr.mxu0 0.0
    %846 = vmatpush1.msra.mxu0 %v406
    %847 = vmatprep.subr.mxu0 0.0
    %848 = vmatpush1.msra.mxu0 %v407
    %849 = vmatprep.subr.mxu0 0.0
    %850 = vmatpush1.msra.mxu0 %v408
    %851 = vmatprep.subr.mxu0 0.0
    %852 = vmatpush1.msra.mxu0 %v409
    %853 = vmatprep.subr.mxu0 0.0
    %854 = vmatpush1.msra.mxu0 %v410
    %855 = vmatprep.subr.mxu0 0.0
    %856 = vmatpush1.msra.mxu0 %v411
    %857 = vmatprep.subr.mxu0 0.0
    %858 = vmatpush1.msra.mxu0 %v412
    %859 = vmatprep.subr.mxu0 0.0
    %860 = vmatpush1.msra.mxu0 %v413
    %861 = vmatprep.subr.mxu0 0.0
    %862 = vmatpush1.msra.mxu0 %v414
    %863 = vmatprep.subr.mxu0 0.0
    %864 = vmatpush1.msra.mxu0 %v415
    %865 = vmatprep.subr.mxu0 0.0
    %866 = vmatpush1.msra.mxu0 %v416
    %867 = vmatprep.subr.mxu0 0.0
    %868 = vmatpush1.msra.mxu0 %v417
    %869 = vmatprep.subr.mxu0 0.0
    %870 = vmatpush1.msra.mxu0 %v418
    %871 = vmatprep.subr.mxu0 0.0
    %872 = vmatpush1.msra.mxu0 %v419
    %873 = vmatprep.subr.mxu0 0.0
    %874 = vmatpush1.msra.mxu0 %v420
    %875 = vmatprep.subr.mxu0 0.0
    %876 = vmatpush1.msra.mxu0 %v421
    %877 = vmatprep.subr.mxu0 0.0
    %878 = vmatpush1.msra.mxu0 %v422
    %879 = vmatprep.subr.mxu0 0.0
    %880 = vmatpush1.msra.mxu0 %v423
    %881 = vmatprep.subr.mxu0 0.0
    %882 = vmatpush1.msra.mxu0 %v424
    %883 = vmatprep.subr.mxu0 0.0
    %884 = vmatpush1.msra.mxu0 %v425
    %885 = vmatprep.mubr.f32.mxu0 %v629
    %886 = vmatmul.mubr.f32.gmra.mrb[0].mxu0 %v621
    %v887 = vpop.f32.mrb[0].mxu0
    %v888 = vadd.f32 %v818, %v887
    %v889 = vpop.f32.mrb[0].mxu0
    %890 = vdwg.mxu0
    %891 = vmatprep.subr.mxu0 0.0
    %892 = vmatpush1.msra.mxu0 %v426
    %893 = vmatprep.subr.mxu0 0.0
    %894 = vmatpush1.msra.mxu0 %v427
    %895 = vmatprep.subr.mxu0 0.0
    %896 = vmatpush1.msra.mxu0 %v428
    %897 = vmatprep.subr.mxu0 0.0
    %898 = vmatpush1.msra.mxu0 %v429
    %899 = vmatprep.subr.mxu0 0.0
    %900 = vmatpush1.msra.mxu0 %v430
    %901 = vmatprep.subr.mxu0 0.0
    %902 = vmatpush1.msra.mxu0 %v431
    %903 = vmatprep.subr.mxu0 0.0
    %904 = vmatpush1.msra.mxu0 %v432
    %905 = vmatprep.subr.mxu0 0.0
    %906 = vmatpush1.msra.mxu0 %v433
    %907 = vmatprep.subr.mxu0 0.0
    %908 = vmatpush1.msra.mxu0 %v434
    %909 = vmatprep.subr.mxu0 0.0
    %910 = vmatpush1.msra.mxu0 %v435
    %911 = vmatprep.subr.mxu0 0.0
    %912 = vmatpush1.msra.mxu0 %v436
    %913 = vmatprep.subr.mxu0 0.0
    %914 = vmatpush1.msra.mxu0 %v437
    %915 = vmatprep.subr.mxu0 0.0
    %916 = vmatpush1.msra.mxu0 %v438
    %917 = vmatprep.subr.mxu0 0.0
    %918 = vmatpush1.msra.mxu0 %v439
    %919 = vmatprep.subr.mxu0 0.0
    %920 = vmatpush1.msra.mxu0 %v440
    %921 = vmatprep.subr.mxu0 0.0
    %922 = vmatpush1.msra.mxu0 %v441
    %923 = vmatprep.subr.mxu0 0.0
    %924 = vmatpush1.msra.mxu0 %v442
    %925 = vmatprep.subr.mxu0 0.0
    %926 = vmatpush1.msra.mxu0 %v443
    %927 = vmatprep.subr.mxu0 0.0
    %928 = vmatpush1.msra.mxu0 %v444
    %929 = vmatprep.subr.mxu0 0.0
    %930 = vmatpush1.msra.mxu0 %v445
    %931 = vmatprep.subr.mxu0 0.0
    %932 = vmatpush1.msra.mxu0 %v446
    %933 = vmatprep.subr.mxu0 0.0
    %934 = vmatpush1.msra.mxu0 %v447
    %935 = vmatprep.subr.mxu0 0.0
    %936 = vmatpush1.msra.mxu0 %v448
    %937 = vmatprep.subr.mxu0 0.0
    %938 = vmatpush1.msra.mxu0 %v449
    %939 = vmatprep.subr.mxu0 0.0
    %940 = vmatpush1.msra.mxu0 %v450
    %941 = vmatprep.subr.mxu0 0.0
    %942 = vmatpush1.msra.mxu0 %v451
    %943 = vmatprep.subr.mxu0 0.0
    %944 = vmatpush1.msra.mxu0 %v452
    %945 = vmatprep.subr.mxu0 0.0
    %946 = vmatpush1.msra.mxu0 %v453
    %947 = vmatprep.subr.mxu0 0.0
    %948 = vmatpush1.msra.mxu0 %v454
    %949 = vmatprep.subr.mxu0 0.0
    %950 = vmatpush1.msra.mxu0 %v455
    %951 = vmatprep.subr.mxu0 0.0
    %952 = vmatpush1.msra.mxu0 %v456
    %953 = vmatprep.subr.mxu0 0.0
    %954 = vmatpush1.msra.mxu0 %v457
    %955 = vmatprep.mubr.f32.mxu0 %v630
    %956 = vmatmul.mubr.f32.gmra.mrb[0].mxu0 %v628
    %v957 = vpop.f32.mrb[0].mxu0
    %v958 = vadd.f32 %v888, %v957
    %v959 = vpop.f32.mrb[0].mxu0
    %960 = vdwg.mxu0
    %961 = vmatprep.subr.mxu0 0.0
    %962 = vmatpush1.msra.mxu0 %v458
    %963 = vmatprep.subr.mxu0 0.0
    %964 = vmatpush1.msra.mxu0 %v459
    %965 = vmatprep.subr.mxu0 0.0
    %966 = vmatpush1.msra.mxu0 %v460
    %967 = vmatprep.subr.mxu0 0.0
    %968 = vmatpush1.msra.mxu0 %v461
    %969 = vmatprep.subr.mxu0 0.0
    %970 = vmatpush1.msra.mxu0 %v462
    %971 = vmatprep.subr.mxu0 0.0
    %972 = vmatpush1.msra.mxu0 %v463
    %973 = vmatprep.subr.mxu0 0.0
    %974 = vmatpush1.msra.mxu0 %v464
    %975 = vmatprep.subr.mxu0 0.0
    %976 = vmatpush1.msra.mxu0 %v465
    %977 = vmatprep.subr.mxu0 0.0
    %978 = vmatpush1.msra.mxu0 %v466
    %979 = vmatprep.subr.mxu0 0.0
    %980 = vmatpush1.msra.mxu0 %v467
    %981 = vmatprep.subr.mxu0 0.0
    %982 = vmatpush1.msra.mxu0 %v468
    %983 = vmatprep.subr.mxu0 0.0
    %984 = vmatpush1.msra.mxu0 %v469
    %985 = vmatprep.subr.mxu0 0.0
    %986 = vmatpush1.msra.mxu0 %v470
    %987 = vmatprep.subr.mxu0 0.0
    %988 = vmatpush1.msra.mxu0 %v471
    %989 = vmatprep.subr.mxu0 0.0
    %990 = vmatpush1.msra.mxu0 %v472
    %991 = vmatprep.subr.mxu0 0.0
    %992 = vmatpush1.msra.mxu0 %v473
    %993 = vmatprep.subr.mxu0 0.0
    %994 = vmatpush1.msra.mxu0 %v474
    %995 = vmatprep.subr.mxu0 0.0
    %996 = vmatpush1.msra.mxu0 %v475
    %997 = vmatprep.subr.mxu0 0.0
    %998 = vmatpush1.msra.mxu0 %v476
    %999 = vmatprep.subr.mxu0 0.0
    %1000 = vmatpush1.msra.mxu0 %v477
    %1001 = vmatprep.subr.mxu0 0.0
    %1002 = vmatpush1.msra.mxu0 %v478
    %1003 = vmatprep.subr.mxu0 0.0
    %1004 = vmatpush1.msra.mxu0 %v479
    %1005 = vmatprep.subr.mxu0 0.0
    %1006 = vmatpush1.msra.mxu0 %v480
    %1007 = vmatprep.subr.mxu0 0.0
    %1008 = vmatpush1.msra.mxu0 %v481
    %1009 = vmatprep.subr.mxu0 0.0
    %1010 = vmatpush1.msra.mxu0 %v482
    %1011 = vmatprep.subr.mxu0 0.0
    %1012 = vmatpush1.msra.mxu0 %v483
    %1013 = vmatprep.subr.mxu0 0.0
    %1014 = vmatpush1.msra.mxu0 %v484
    %1015 = vmatprep.subr.mxu0 0.0
    %1016 = vmatpush1.msra.mxu0 %v485
    %1017 = vmatprep.subr.mxu0 0.0
    %1018 = vmatpush1.msra.mxu0 %v486
    %1019 = vmatprep.subr.mxu0 0.0
    %1020 = vmatpush1.msra.mxu0 %v487
    %1021 = vmatprep.subr.mxu0 0.0
    %1022 = vmatpush1.msra.mxu0 %v488
    %1023 = vmatprep.subr.mxu0 0.0
    %1024 = vmatpush1.msra.mxu0 %v489
    %1025 = vmatprep.mubr.f32.mxu0 %v646
    %1026 = vmatmul.mubr.f32.gmra.mrb[0].mxu0 %v638
    %v1027 = vpop.f32.mrb[0].mxu0
    %v1028 = vadd.f32 %v958, %v1027
    %v1029 = vpop.f32.mrb[0].mxu0
    %1030 = vdwg.mxu0
    %1031 = vmatprep.subr.mxu0 0.0
    %1032 = vmatpush1.msra.mxu0 %v490
    %1033 = vmatprep.subr.mxu0 0.0
    %1034 = vmatpush1.msra.mxu0 %v491
    %1035 = vmatprep.subr.mxu0 0.0
    %1036 = vmatpush1.msra.mxu0 %v492
    %1037 = vmatprep.subr.mxu0 0.0
    %1038 = vmatpush1.msra.mxu0 %v493
    %1039 = vmatprep.subr.mxu0 0.0
    %1040 = vmatpush1.msra.mxu0 %v494
    %1041 = vmatprep.subr.mxu0 0.0
    %1042 = vmatpush1.msra.mxu0 %v495
    %1043 = vmatprep.subr.mxu0 0.0
    %1044 = vmatpush1.msra.mxu0 %v496
    %1045 = vmatprep.subr.mxu0 0.0
    %1046 = vmatpush1.msra.mxu0 %v497
    %1047 = vmatprep.subr.mxu0 0.0
    %1048 = vmatpush1.msra.mxu0 %v498
    %1049 = vmatprep.subr.mxu0 0.0
    %1050 = vmatpush1.msra.mxu0 %v499
    %1051 = vmatprep.subr.mxu0 0.0
    %1052 = vmatpush1.msra.mxu0 %v500
    %1053 = vmatprep.subr.mxu0 0.0
    %1054 = vmatpush1.msra.mxu0 %v501
    %1055 = vmatprep.subr.mxu0 0.0
    %1056 = vmatpush1.msra.mxu0 %v502
    %1057 = vmatprep.subr.mxu0 0.0
    %1058 = vmatpush1.msra.mxu0 %v503
    %1059 = vmatprep.subr.mxu0 0.0
    %1060 = vmatpush1.msra.mxu0 %v504
    %1061 = vmatprep.subr.mxu0 0.0
    %1062 = vmatpush1.msra.mxu0 %v505
    %1063 = vmatprep.subr.mxu0 0.0
    %1064 = vmatpush1.msra.mxu0 %v506
    %1065 = vmatprep.subr.mxu0 0.0
    %1066 = vmatpush1.msra.mxu0 %v507
    %1067 = vmatprep.subr.mxu0 0.0
    %1068 = vmatpush1.msra.mxu0 %v508
    %1069 = vmatprep.subr.mxu0 0.0
    %1070 = vmatpush1.msra.mxu0 %v509
    %1071 = vmatprep.subr.mxu0 0.0
    %1072 = vmatpush1.msra.mxu0 %v510
    %1073 = vmatprep.subr.mxu0 0.0
    %1074 = vmatpush1.msra.mxu0 %v511
    %1075 = vmatprep.subr.mxu0 0.0
    %1076 = vmatpush1.msra.mxu0 %v512
    %1077 = vmatprep.subr.mxu0 0.0
    %1078 = vmatpush1.msra.mxu0 %v513
    %1079 = vmatprep.subr.mxu0 0.0
    %1080 = vmatpush1.msra.mxu0 %v514
    %1081 = vmatprep.subr.mxu0 0.0
    %1082 = vmatpush1.msra.mxu0 %v515
    %1083 = vmatprep.subr.mxu0 0.0
    %1084 = vmatpush1.msra.mxu0 %v516
    %1085 = vmatprep.subr.mxu0 0.0
    %1086 = vmatpush1.msra.mxu0 %v517
    %1087 = vmatprep.subr.mxu0 0.0
    %1088 = vmatpush1.msra.mxu0 %v518
    %1089 = vmatprep.subr.mxu0 0.0
    %1090 = vmatpush1.msra.mxu0 %v519
    %1091 = vmatprep.subr.mxu0 0.0
    %1092 = vmatpush1.msra.mxu0 %v520
    %1093 = vmatprep.subr.mxu0 0.0
    %1094 = vmatpush1.msra.mxu0 %v521
    %1095 = vmatprep.mubr.f32.mxu0 %v647
    %1096 = vmatmul.mubr.f32.gmra.mrb[0].mxu0 %v645
    %v1097 = vpop.f32.mrb[0].mxu0
    %v1098 = vadd.f32 %v1028, %v1097
    %v1099 = vpop.f32.mrb[0].mxu0
    %1100 = vdwg.mxu0
    %1101 = vmatprep.subr.mxu0 0.0
    %1102 = vmatpush1.msra.mxu0 %v522
    %1103 = vmatprep.subr.mxu0 0.0
    %1104 = vmatpush1.msra.mxu0 %v523
    %1105 = vmatprep.subr.mxu0 0.0
    %1106 = vmatpush1.msra.mxu0 %v524
    %1107 = vmatprep.subr.mxu0 0.0
    %1108 = vmatpush1.msra.mxu0 %v525
    %1109 = vmatprep.subr.mxu0 0.0
    %1110 = vmatpush1.msra.mxu0 %v526
    %1111 = vmatprep.subr.mxu0 0.0
    %1112 = vmatpush1.msra.mxu0 %v527
    %1113 = vmatprep.subr.mxu0 0.0
    %1114 = vmatpush1.msra.mxu0 %v528
    %1115 = vmatprep.subr.mxu0 0.0
    %1116 = vmatpush1.msra.mxu0 %v529
    %1117 = vmatprep.subr.mxu0 0.0
    %1118 = vmatpush1.msra.mxu0 %v530
    %1119 = vmatprep.subr.mxu0 0.0
    %1120 = vmatpush1.msra.mxu0 %v531
    %1121 = vmatprep.subr.mxu0 0.0
    %1122 = vmatpush1.msra.mxu0 %v532
    %1123 = vmatprep.subr.mxu0 0.0
    %1124 = vmatpush1.msra.mxu0 %v533
    %1125 = vmatprep.subr.mxu0 0.0
    %1126 = vmatpush1.msra.mxu0 %v534
    %1127 = vmatprep.subr.mxu0 0.0
    %1128 = vmatpush1.msra.mxu0 %v535
    %1129 = vmatprep.subr.mxu0 0.0
    %1130 = vmatpush1.msra.mxu0 %v536
    %1131 = vmatprep.subr.mxu0 0.0
    %1132 = vmatpush1.msra.mxu0 %v537
    %1133 = vmatprep.subr.mxu0 0.0
    %1134 = vmatpush1.msra.mxu0 %v538
    %1135 = vmatprep.subr.mxu0 0.0
    %1136 = vmatpush1.msra.mxu0 %v539
    %1137 = vmatprep.subr.mxu0 0.0
    %1138 = vmatpush1.msra.mxu0 %v540
    %1139 = vmatprep.subr.mxu0 0.0
    %1140 = vmatpush1.msra.mxu0 %v541
    %1141 = vmatprep.subr.mxu0 0.0
    %1142 = vmatpush1.msra.mxu0 %v542
    %1143 = vmatprep.subr.mxu0 0.0
    %1144 = vmatpush1.msra.mxu0 %v543
    %1145 = vmatprep.subr.mxu0 0.0
    %1146 = vmatpush1.msra.mxu0 %v544
    %1147 = vmatprep.subr.mxu0 0.0
    %1148 = vmatpush1.msra.mxu0 %v545
    %1149 = vmatprep.subr.mxu0 0.0
    %1150 = vmatpush1.msra.mxu0 %v546
    %1151 = vmatprep.subr.mxu0 0.0
    %1152 = vmatpush1.msra.mxu0 %v547
    %1153 = vmatprep.subr.mxu0 0.0
    %1154 = vmatpush1.msra.mxu0 %v548
    %1155 = vmatprep.subr.mxu0 0.0
    %1156 = vmatpush1.msra.mxu0 %v549
    %1157 = vmatprep.subr.mxu0 0.0
    %1158 = vmatpush1.msra.mxu0 %v550
    %1159 = vmatprep.subr.mxu0 0.0
    %1160 = vmatpush1.msra.mxu0 %v551
    %1161 = vmatprep.subr.mxu0 0.0
    %1162 = vmatpush1.msra.mxu0 %v552
    %1163 = vmatprep.subr.mxu0 0.0
    %1164 = vmatpush1.msra.mxu0 %v553
    %1165 = vmatprep.mubr.f32.mxu0 %v663
    %1166 = vmatmul.mubr.f32.gmra.mrb[0].mxu0 %v655
    %v1167 = vpop.f32.mrb[0].mxu0
    %v1168 = vadd.f32 %v1098, %v1167
    %v1169 = vpop.f32.mrb[0].mxu0
    %1170 = vdwg.mxu0
    %1171 = vmatprep.subr.mxu0 0.0
    %1172 = vmatpush1.msra.mxu0 %v554
    %1173 = vmatprep.subr.mxu0 0.0
    %1174 = vmatpush1.msra.mxu0 %v555
    %1175 = vmatprep.subr.mxu0 0.0
    %1176 = vmatpush1.msra.mxu0 %v556
    %1177 = vmatprep.subr.mxu0 0.0
    %1178 = vmatpush1.msra.mxu0 %v557
    %1179 = vmatprep.subr.mxu0 0.0
    %1180 = vmatpush1.msra.mxu0 %v558
    %1181 = vmatprep.subr.mxu0 0.0
    %1182 = vmatpush1.msra.mxu0 %v559
    %1183 = vmatprep.subr.mxu0 0.0
    %1184 = vmatpush1.msra.mxu0 %v560
    %1185 = vmatprep.subr.mxu0 0.0
    %1186 = vmatpush1.msra.mxu0 %v561
    %1187 = vmatprep.subr.mxu0 0.0
    %1188 = vmatpush1.msra.mxu0 %v562
    %1189 = vmatprep.subr.mxu0 0.0
    %1190 = vmatpush1.msra.mxu0 %v563
    %1191 = vmatprep.subr.mxu0 0.0
    %1192 = vmatpush1.msra.mxu0 %v564
    %1193 = vmatprep.subr.mxu0 0.0
    %1194 = vmatpush1.msra.mxu0 %v565
    %1195 = vmatprep.subr.mxu0 0.0
    %1196 = vmatpush1.msra.mxu0 %v566
    %1197 = vmatprep.subr.mxu0 0.0
    %1198 = vmatpush1.msra.mxu0 %v567
    %1199 = vmatprep.subr.mxu0 0.0
    %1200 = vmatpush1.msra.mxu0 %v568
    %1201 = vmatprep.subr.mxu0 0.0
    %1202 = vmatpush1.msra.mxu0 %v569
    %1203 = vmatprep.subr.mxu0 0.0
    %1204 = vmatpush1.msra.mxu0 %v570
    %1205 = vmatprep.subr.mxu0 0.0
    %1206 = vmatpush1.msra.mxu0 %v571
    %1207 = vmatprep.subr.mxu0 0.0
    %1208 = vmatpush1.msra.mxu0 %v572
    %1209 = vmatprep.subr.mxu0 0.0
    %1210 = vmatpush1.msra.mxu0 %v573
    %1211 = vmatprep.subr.mxu0 0.0
    %1212 = vmatpush1.msra.mxu0 %v574
    %1213 = vmatprep.subr.mxu0 0.0
    %1214 = vmatpush1.msra.mxu0 %v575
    %1215 = vmatprep.subr.mxu0 0.0
    %1216 = vmatpush1.msra.mxu0 %v576
    %1217 = vmatprep.subr.mxu0 0.0
    %1218 = vmatpush1.msra.mxu0 %v577
    %1219 = vmatprep.subr.mxu0 0.0
    %1220 = vmatpush1.msra.mxu0 %v578
    %1221 = vmatprep.subr.mxu0 0.0
    %1222 = vmatpush1.msra.mxu0 %v579
    %1223 = vmatprep.subr.mxu0 0.0
    %1224 = vmatpush1.msra.mxu0 %v580
    %1225 = vmatprep.subr.mxu0 0.0
    %1226 = vmatpush1.msra.mxu0 %v581
    %1227 = vmatprep.subr.mxu0 0.0
    %1228 = vmatpush1.msra.mxu0 %v582
    %1229 = vmatprep.subr.mxu0 0.0
    %1230 = vmatpush1.msra.mxu0 %v583
    %1231 = vmatprep.subr.mxu0 0.0
    %1232 = vmatpush1.msra.mxu0 %v584
    %1233 = vmatprep.subr.mxu0 0.0
    %1234 = vmatpush1.msra.mxu0 %v585
    %1235 = vmatprep.mubr.f32.mxu0 %v664
    %1236 = vmatmul.mubr.f32.gmra.mrb[0].mxu0 %v662
    %v1237 = vpop.f32.mrb[0].mxu0
    %v1238 = vadd.f32 %v1168, %v1237
    %v1239 = vpop.f32.mrb[0].mxu0
    %1240 = vdwg.mxu0
    %v1241 = vmax.f32 %v1238, 0.0
    %p1242 = scmp.eq.s32.totalorder 0, 0
    // Predicated region
    $region30: #{slni_module_forward.1} parent=1 // pred_check
      %p1243 = pneg %p1242
    $region31: #{slni_module_forward.1} parent=1 // pred_check_branch
      %1245 = sbr.rel (%p1243) target = $region33
    $region32: #{slni_module_forward.1} parent=1 // pred_region
      %vm1246 = vcmask 261120
      %1247 = vst.msk [vmem:[#allocation3] sm:$0xff] %vm1246, 0.0
      %1248 = vst.msk [vmem:[#allocation3 + $0x8] sm:$0xff] %vm1246, 0.0
      %1249 = vst.msk [vmem:[#allocation3 + $0x10] sm:$0xff] %vm1246, 0.0
      %1250 = vst.msk [vmem:[#allocation3 + $0x18] sm:$0xff] %vm1246, 0.0
    $region33: #{slni_module_forward.1} parent=1 // pred_fallthru
      _
    %v1251 = vld [vmem:[#allocation3] sm:$0xff]
    %v1252 = vld [vmem:[#allocation3 + $0x8] sm:$0xff]
    %v1253 = vld [vmem:[#allocation3 + $0x10] sm:$0xff]
    %v1254 = vld [vmem:[#allocation3 + $0x18] sm:$0xff]
    %1255 = vxpose.xlu0.b32.start [1/16] %v1241, 128
    %1256 = vxpose.xlu0.b32.cont [2/16] 0.0, 128
    %1257 = vxpose.xlu0.b32.cont [3/16] 0.0, 128
    %1258 = vxpose.xlu0.b32.cont [4/16] 0.0, 128
    %1259 = vxpose.xlu0.b32.cont [5/16] 0.0, 128
    %1260 = vxpose.xlu0.b32.cont [6/16] 0.0, 128
    %1261 = vxpose.xlu0.b32.cont [7/16] 0.0, 128
    %1262 = vxpose.xlu0.b32.cont [8/16] 0.0, 128
    %1263 = vxpose.xlu0.b32.cont [9/16] 0.0, 128
    %1264 = vxpose.xlu0.b32.cont [10/16] 0.0, 128
    %1265 = vxpose.xlu0.b32.cont [11/16] 0.0, 128
    %1266 = vxpose.xlu0.b32.cont [12/16] 0.0, 128
    %1267 = vxpose.xlu0.b32.cont [13/16] 0.0, 128
    %1268 = vxpose.xlu0.b32.cont [14/16] 0.0, 128
    %1269 = vxpose.xlu0.b32.cont [15/16] 0.0, 128
    %1270 = vxpose.xlu0.b32.end [16/16] 0.0, 128
    %v1271 = vpop.trf.xlu0
    %v1272 = vpop.trf.xlu0
    %v1273 = vpop.trf.xlu0
    %v1274 = vpop.trf.xlu0
    %v1275 = vpop.trf.xlu0
    %v1276 = vpop.trf.xlu0
    %v1277 = vpop.trf.xlu0
    %v1278 = vpop.trf.xlu0
    %v1279 = vpop.trf.xlu0
    %v1280 = vpop.trf.xlu0
    %v1281 = vpop.trf.xlu0
    %v1282 = vpop.trf.xlu0
    %v1283 = vpop.trf.xlu0
    %v1284 = vpop.trf.xlu0
    %v1285 = vpop.trf.xlu0
    %v1286 = vpop.trf.xlu0
    %vm1287 = vcmask 15360
    %v1289 = vsel %vm1287, %v1271, 0
    %v1292 = vsel %vm1287, %v1272, 0
    %v1295 = vsel %vm1287, %v1273, 0
    %v1298 = vsel %vm1287, %v1274, 0
    %vm1300 = vcmask 1041408
    %v1302 = vsel %vm1300, %v1241, 0
    %1304 = vmatprep.subr.mxu0 0.0
    %1305 = vmatpush1.msra.mxu0 %v1302
    %1306 = vmatprep.subr.mxu0 0.0
    %1307 = vmatpush1.msra.mxu0 0.0
    %1308 = vmatprep.subr.mxu0 0.0
    %1309 = vmatpush1.msra.mxu0 0.0
    %1310 = vmatprep.subr.mxu0 0.0
    %1311 = vmatpush1.msra.mxu0 0.0
    %1312 = vmatprep.subr.mxu0 0.0
    %1313 = vmatpush1.msra.mxu0 0.0
    %1314 = vmatprep.subr.mxu0 0.0
    %1315 = vmatpush1.msra.mxu0 0.0
    %1316 = vmatprep.subr.mxu0 0.0
    %1317 = vmatpush1.msra.mxu0 0.0
    %1318 = vmatprep.subr.mxu0 0.0
    %1319 = vmatpush1.msra.mxu0 0.0
    %1320 = vmatprep.subr.mxu0 0.0
    %1321 = vmatpush1.msra.mxu0 0.0
    %1322 = vmatprep.subr.mxu0 0.0
    %1323 = vmatpush1.msra.mxu0 0.0
    %1324 = vmatprep.subr.mxu0 0.0
    %1325 = vmatpush1.msra.mxu0 0.0
    %1326 = vmatprep.subr.mxu0 0.0
    %1327 = vmatpush1.msra.mxu0 0.0
    %1328 = vmatprep.subr.mxu0 0.0
    %1329 = vmatpush1.msra.mxu0 0.0
    %1330 = vmatprep.subr.mxu0 0.0
    %1331 = vmatpush1.msra.mxu0 0.0
    %1332 = vmatprep.subr.mxu0 0.0
    %1333 = vmatpush1.msra.mxu0 0.0
    %1334 = vmatprep.subr.mxu0 0.0
    %1335 = vmatpush1.msra.mxu0 0.0
    %1336 = vmatprep.subr.mxu0 0.0
    %1337 = vmatpush1.msra.mxu0 0.0
    %1338 = vmatprep.subr.mxu0 0.0
    %1339 = vmatpush1.msra.mxu0 0.0
    %1340 = vmatprep.subr.mxu0 0.0
    %1341 = vmatpush1.msra.mxu0 0.0
    %1342 = vmatprep.subr.mxu0 0.0
    %1343 = vmatpush1.msra.mxu0 0.0
    %1344 = vmatprep.subr.mxu0 0.0
    %1345 = vmatpush1.msra.mxu0 0.0
    %1346 = vmatprep.subr.mxu0 0.0
    %1347 = vmatpush1.msra.mxu0 0.0
    %1348 = vmatprep.subr.mxu0 0.0
    %1349 = vmatpush1.msra.mxu0 0.0
    %1350 = vmatprep.subr.mxu0 0.0
    %1351 = vmatpush1.msra.mxu0 0.0
    %1352 = vmatprep.subr.mxu0 0.0
    %1353 = vmatpush1.msra.mxu0 0.0
    %1354 = vmatprep.subr.mxu0 0.0
    %1355 = vmatpush1.msra.mxu0 0.0
    %1356 = vmatprep.subr.mxu0 0.0
    %1357 = vmatpush1.msra.mxu0 0.0
    %1358 = vmatprep.subr.mxu0 0.0
    %1359 = vmatpush1.msra.mxu0 0.0
    %1360 = vmatprep.subr.mxu0 0.0
    %1361 = vmatpush1.msra.mxu0 0.0
    %1362 = vmatprep.subr.mxu0 0.0
    %1363 = vmatpush1.msra.mxu0 0.0
    %1364 = vmatprep.subr.mxu0 0.0
    %1365 = vmatpush1.msra.mxu0 0.0
    %1366 = vmatprep.subr.mxu0 0.0
    %1367 = vmatpush1.msra.mxu0 0.0
    %1368 = vmatprep.mubr.f32.mxu0 0.0
    %1369 = vmatmul.mubr.f32.gmra.mrb[0].mxu0 %v1289
    %v1370 = vpop.f32.mrb[0].mxu0
    %v1371 = vadd.f32 0.0, %v1370
    %v1372 = vpop.f32.mrb[0].mxu0
    %1373 = vmatprep.mubr.f32.mxu0 0.0
    %1374 = vmatmul.mubr.f32.gmra.mrb[0].mxu0 %v1292
    %v1375 = vpop.f32.mrb[0].mxu0
    %v1376 = vadd.f32 0.0, %v1375
    %v1377 = vpop.f32.mrb[0].mxu0
    %1378 = vmatprep.mubr.f32.mxu0 0.0
    %1379 = vmatmul.mubr.f32.gmra.mrb[0].mxu0 %v1295
    %v1380 = vpop.f32.mrb[0].mxu0
    %v1381 = vadd.f32 0.0, %v1380
    %v1382 = vpop.f32.mrb[0].mxu0
    %1383 = vmatprep.mubr.f32.mxu0 0.0
    %1384 = vmatmul.mubr.f32.gmra.mrb[0].mxu0 %v1298
    %v1385 = vpop.f32.mrb[0].mxu0
    %v1386 = vadd.f32 0.0, %v1385
    %v1387 = vpop.f32.mrb[0].mxu0
    %1388 = vdwg.mxu0
    %v1389 = vadd.f32 %v1251, %v1371
    %v1390 = vadd.f32 %v1252, %v1376
    %v1391 = vadd.f32 %v1253, %v1381
    %v1392 = vadd.f32 %v1254, %v1386
    %vm1393 = vcmask 261120
    %1394 = vst.msk [vmem:[#allocation3] sm:$0xff] %vm1393, %v1389
    %1395 = vst.msk [vmem:[#allocation3 + $0x8] sm:$0xff] %vm1393, %v1390
    %1396 = vst.msk [vmem:[#allocation3 + $0x10] sm:$0xff] %vm1393, %v1391
    %1397 = vst.msk [vmem:[#allocation3 + $0x18] sm:$0xff] %vm1393, %v1392
    %v1398 = vld [vmem:[%s5] sm:$0xff]
    %v1399 = vld [vmem:[%s5 + $0x8] sm:$0xff]
    %v1400 = vld [vmem:[%s5 + $0x10] sm:$0xff]
    %v1401 = vld [vmem:[%s5 + $0x18] sm:$0xff]
    %v1402 = vld [vmem:[%s6] sm:$0x1]
    %v1404 = vlaneseq
    %v1405 = vshrl.u32 %v1404, 7
    %v1406 = vsub.s32 0, %v1405
    %v1407 = vrot.slane %v1402, %v1406
    %v1409 = vsel %vm1393, %v1241, 0
    %1411 = vmatprep.subr.mxu0 0.0
    %1412 = vmatpush1.msra.mxu0 %v1398
    %1413 = vmatprep.subr.mxu0 0.0
    %1414 = vmatpush1.msra.mxu0 %v1399
    %1415 = vmatprep.subr.mxu0 0.0
    %1416 = vmatpush1.msra.mxu0 %v1400
    %1417 = vmatprep.subr.mxu0 0.0
    %1418 = vmatpush1.msra.mxu0 %v1401
    %1419 = vmatprep.subr.mxu0 0.0
    %1420 = vmatpush1.msra.mxu0 0.0
    %1421 = vmatprep.subr.mxu0 0.0
    %1422 = vmatpush1.msra.mxu0 0.0
    %1423 = vmatprep.subr.mxu0 0.0
    %1424 = vmatpush1.msra.mxu0 0.0
    %1425 = vmatprep.subr.mxu0 0.0
    %1426 = vmatpush1.msra.mxu0 0.0
    %1427 = vmatprep.subr.mxu0 0.0
    %1428 = vmatpush1.msra.mxu0 0.0
    %1429 = vmatprep.subr.mxu0 0.0
    %1430 = vmatpush1.msra.mxu0 0.0
    %1431 = vmatprep.subr.mxu0 0.0
    %1432 = vmatpush1.msra.mxu0 0.0
    %1433 = vmatprep.subr.mxu0 0.0
    %1434 = vmatpush1.msra.mxu0 0.0
    %1435 = vmatprep.subr.mxu0 0.0
    %1436 = vmatpush1.msra.mxu0 0.0
    %1437 = vmatprep.subr.mxu0 0.0
    %1438 = vmatpush1.msra.mxu0 0.0
    %1439 = vmatprep.subr.mxu0 0.0
    %1440 = vmatpush1.msra.mxu0 0.0
    %1441 = vmatprep.subr.mxu0 0.0
    %1442 = vmatpush1.msra.mxu0 0.0
    %1443 = vmatprep.subr.mxu0 0.0
    %1444 = vmatpush1.msra.mxu0 0.0
    %1445 = vmatprep.subr.mxu0 0.0
    %1446 = vmatpush1.msra.mxu0 0.0
    %1447 = vmatprep.subr.mxu0 0.0
    %1448 = vmatpush1.msra.mxu0 0.0
    %1449 = vmatprep.subr.mxu0 0.0
    %1450 = vmatpush1.msra.mxu0 0.0
    %1451 = vmatprep.subr.mxu0 0.0
    %1452 = vmatpush1.msra.mxu0 0.0
    %1453 = vmatprep.subr.mxu0 0.0
    %1454 = vmatpush1.msra.mxu0 0.0
    %1455 = vmatprep.subr.mxu0 0.0
    %1456 = vmatpush1.msra.mxu0 0.0
    %1457 = vmatprep.subr.mxu0 0.0
    %1458 = vmatpush1.msra.mxu0 0.0
    %1459 = vmatprep.subr.mxu0 0.0
    %1460 = vmatpush1.msra.mxu0 0.0
    %1461 = vmatprep.subr.mxu0 0.0
    %1462 = vmatpush1.msra.mxu0 0.0
    %1463 = vmatprep.subr.mxu0 0.0
    %1464 = vmatpush1.msra.mxu0 0.0
    %1465 = vmatprep.subr.mxu0 0.0
    %1466 = vmatpush1.msra.mxu0 0.0
    %1467 = vmatprep.subr.mxu0 0.0
    %1468 = vmatpush1.msra.mxu0 0.0
    %1469 = vmatprep.subr.mxu0 0.0
    %1470 = vmatpush1.msra.mxu0 0.0
    %1471 = vmatprep.subr.mxu0 0.0
    %1472 = vmatpush1.msra.mxu0 0.0
    %1473 = vmatprep.subr.mxu0 0.0
    %1474 = vmatpush1.msra.mxu0 0.0
    %1475 = vmatprep.mubr.f32.mxu0 0.0
    %1476 = vmatmul.mubr.f32.gmra.mrb[0].mxu0 %v1409
    %v1477 = vpop.f32.mrb[0].mxu0
    %v1478 = vadd.f32 %v1407, %v1477
    %v1479 = vpop.f32.mrb[0].mxu0
    %1480 = vdwg.mxu0
    %1481 = vst [vmem:[#allocation4] sm:$0x3] %v1478
    // Predicated region
    $region34: #{slni_module_forward.1} parent=1 // pred_check
      %p1482 = pneg %p1242
    $region35: #{slni_module_forward.1} parent=1 // pred_check_branch
      %1484 = sbr.rel (%p1482) target = $region37
    $region36: #{slni_module_forward.1} parent=1 // pred_region
      %v1485 = vld [vmem:[#allocation3] sm:$0xff]
      %v1486 = vld [vmem:[#allocation3 + $0x8] sm:$0xff]
      %v1487 = vld [vmem:[#allocation3 + $0x10] sm:$0xff]
      %v1488 = vld [vmem:[#allocation3 + $0x18] sm:$0xff]
      %v1489 = vmul.f32 %v1485, 0.5
      %v1490 = vmul.f32 %v1486, 0.5
      %v1491 = vmul.f32 %v1487, 0.5
      %v1492 = vmul.f32 %v1488, 0.5
      %v1493 = vlaneseq
      %v1494 = vand.u32 %v1493, 127
      %vm1495 = vcmp.eq.s32.totalorder %v35, %v1494
      %vm1496 = vcmp.eq.s32.totalorder %v36, %v1494
      %vm1497 = vcmp.eq.s32.totalorder %v37, %v1494
      %vm1498 = vcmp.eq.s32.totalorder %v38, %v1494
      %v1499 = vsel %vm1495, %v1489, 0.0
      %v1500 = vsel %vm1496, %v1490, 0.0
      %v1501 = vsel %vm1497, %v1491, 0.0
      %v1502 = vsel %vm1498, %v1492, 0.0
      %v1503 = vsel %vm1393, %v1499, 0.0
      %v1504 = vsel %vm1393, %v1500, 0.0
      %v1505 = vadd.f32 %v1503, %v1504
      %v1506 = vsel %vm1393, %v1501, 0.0
      %v1507 = vadd.f32 %v1505, %v1506
      %v1508 = vsel %vm1393, %v1502, 0.0
      %v1509 = vadd.f32 %v1507, %v1508
      %1510 = vadd.xlane.f32.xlu0 %v1509
      %v1511 = vpop.xlane.xlu0 %1510
      %v1512 = vrot.slane %v1511, 4
      %v1513 = vadd.f32 %v1511, %v1512
      %v1514 = vrot.slane %v1513, 2
      %v1515 = vadd.f32 %v1513, %v1514
      %v1516 = vrot.slane %v1515, 1
      %v1517 = vadd.f32 %v1515, %v1516
      %s1518 = vtos %v1517
      %v1519 = vand.u32 2147483647, %v1489
      %v1520 = vand.u32 2147483647, %v1490
      %v1521 = vand.u32 2147483647, %v1491
      %v1522 = vand.u32 2147483647, %v1492
      %v1523 = vsel %vm1393, %v1519, 0.0
      %v1524 = vsel %vm1393, %v1520, 0.0
      %v1525 = vadd.f32 %v1523, %v1524
      %v1526 = vsel %vm1393, %v1521, 0.0
      %v1527 = vadd.f32 %v1525, %v1526
      %v1528 = vsel %vm1393, %v1522, 0.0
      %v1529 = vadd.f32 %v1527, %v1528
      %1530 = vadd.xlane.f32.xlu0 %v1529
      %v1531 = vpop.xlane.xlu0 %1530
      %v1532 = vrot.slane %v1531, 4
      %v1533 = vadd.f32 %v1531, %v1532
      %v1534 = vrot.slane %v1533, 2
      %v1535 = vadd.f32 %v1533, %v1534
      %v1536 = vrot.slane %v1535, 1
      %v1537 = vadd.f32 %v1535, %v1536
      %s1538 = vtos %v1537
      %s1539 = ssub.f32 %s1538, %s1518
      %s1540 = scalar_lea.smem [#allocation7], 0
      %1541 = sst [smem:[%s1540]] %s1539
    $region37: #{slni_module_forward.1} parent=1 // pred_fallthru
      _
    // Predicated region
    $region38: #{slni_module_forward.1} parent=1 // pred_check
      _
    $region39: #{slni_module_forward.1} parent=1 // pred_check_branch
      %1543 = sbr.rel (0) target = $region41
    $region40: #{slni_module_forward.1} parent=1 // pred_region
      %s1545 = ssub.s32 32, 32
      %1546 = vsyncadd [#allocation5], %s1545
      %s1548 = sshll.u32 [#allocation4], 4
      %s1549 = int_to_ptr.vmem [resolvable:$true] %s1548
      %1551 = dma.vmem_to_hbm [thread:$0]  %s1549, 32, %s7, [#allocation5]
    $region41: #{slni_module_forward.1} parent=1 // pred_fallthru
      _
    // Predicated region
    $region42: #{slni_module_forward.1} parent=1 // pred_check
      _
    $region43: #{slni_module_forward.1} parent=1 // pred_check_branch
      %1553 = sbr.rel (0) target = $region45
    $region44: #{slni_module_forward.1} parent=1 // pred_region
      %s1555 = ssub.s32 16, 16
      %1556 = vsyncadd [#allocation6], %s1555
      %1559 = dma.smem_to_hbm [#allocation7], 16, %s8, [#allocation6]
    $region45: #{slni_module_forward.1} parent=1 // pred_fallthru
      _
    // Predicated region
    $region46: #{slni_module_forward.1} parent=1 // pred_check
      _
    $region47: #{slni_module_forward.1} parent=1 // pred_check_branch
      %1561 = sbr.rel (0) target = $region49
    $region48: #{slni_module_forward.1} parent=1 // pred_region
      %1562 = dma.done [#allocation5], 32
    $region49: #{slni_module_forward.1} parent=1 // pred_fallthru
      _
    // Predicated region
    $region50: #{slni_module_forward.1} parent=1 // pred_check
      _
    $region51: #{slni_module_forward.1} parent=1 // pred_check_branch
      %1564 = sbr.rel (0) target = $region53
    $region52: #{slni_module_forward.1} parent=1 // pred_region
      %1565 = dma.done [#allocation6], 16
    $region53: #{slni_module_forward.1} parent=1 // pred_fallthru
      _
    %1566 = sfence
    %1567 = vsyncpa [#allocation5], 1
    %1568 = vsyncpa [#allocation6], 1

</llo_original>
